<compile_context>
chip_gen: v6e
topology: v6e:2x2x1
jax: 0.10.0
libtpu: 0.0.40
codegen_flags: <defaults>
</compile_context>

<pallas_src>
import functools

import jax
import jax.numpy as jnp
from jax.experimental import pallas as pl
from jax.experimental.pallas import tpu as pltpu


# ----------------------------------------------------------------------------
# Fused kernel: 1x1 conv + BN + LeakyReLU  ->  3x3 conv + BN + LeakyReLU + add
# ----------------------------------------------------------------------------
def _residual_fused_kernel(x_top_ref, x_body_ref, x_bot_ref,
                           w1_ref, b1_ref, w2_ref, b2_ref, o_ref,
                           *, th, W, slope):
    j = pl.program_id(1)
    nj = pl.num_programs(1)
    Ch = w1_ref.shape[-1]
    R = th + 2                       # body rows + one halo image-row per side

    # ---- stage 1: 1x1 conv (BN1 scale folded into w1) + bias + LeakyReLU ---
    x_all = jnp.concatenate(
        [x_top_ref[...], x_body_ref[...], x_bot_ref[...]], axis=0)   # (R*W, C)
    y1 = jnp.dot(x_all, w1_ref[...], preferred_element_type=jnp.float32)
    y1 = y1 + b1_ref[...]
    y1 = jnp.where(y1 > 0, y1, slope * y1)

    # Halo image-rows that fall outside the picture are conv2's zero padding;
    # that padding lives in y1-space (post BN + activation), so zero them here.
    q = jax.lax.broadcasted_iota(jnp.int32, (R * W, 1), 0)
    pad_row = ((q < W) & (j == 0)) | ((q >= (th + 1) * W) & (j == nj - 1))
    y1 = jnp.where(pad_row, 0.0, y1)

    # ---- stage 2: 3x3 conv as 3 lane-major matmuls with K = 3*Ch -----------
    # kw = -1 / 0 / +1 taps concatenated once along the channel (lane) axis.
    # (pltpu.roll(y1, +/-1, axis=0) is a drop-in alternative for the shifts.)
    col = q % W
    zrow = jnp.zeros((1, Ch), jnp.float32)
    left = jnp.concatenate([zrow, y1[:R * W - 1, :]], axis=0)        # y1[q-1]
    left = jnp.where(col == 0, 0.0, left)
    right = jnp.concatenate([y1[1:, :], zrow], axis=0)               # y1[q+1]
    right = jnp.where(col == W - 1, 0.0, right)
    taps = jnp.concatenate([left, y1, right], axis=-1)               # (R*W, 3*Ch)

    acc = jnp.zeros(o_ref.shape, jnp.float32)
    for kh in range(3):                                              # static unroll
        acc = acc + jnp.dot(taps[kh * W:(kh + th) * W, :], w2_ref[kh],
                            preferred_element_type=jnp.float32)

    # ---- folded BN2 bias + LeakyReLU + residual add -------------------------
    y2 = acc + b2_ref[...]
    y2 = jnp.where(y2 > 0, y2, slope * y2)
    o_ref[...] = (y2 + x_body_ref[...].astype(jnp.float32)).astype(o_ref.dtype)


def _pick_row_tile(H, W, C, N, itemsize):
    # Enough grid steps for megacore + pipelining, while the (th+2)-row block
    # stays small (v7x has only 64 MiB VMEM / 32 MiB scoped default).
    budget = 2 * 1024 * 1024
    for cand in (32, 16, 8, 4, 2, 1):
        if H % cand:
            continue
        if (cand + 2) * W * C * itemsize > budget:
            continue
        if (H // cand) * N >= 4 or cand == 1:
            return cand
    for cand in (32, 16, 8, 4, 2, 1):
        if H % cand == 0:
            return cand
    return 1


def _residual_fused(x_flat, w1, b1, w2cat, b2, *, H, W, slope=0.1, th=None):
    """x_flat: (N, H*W, C) channels-last, flattened spatially."""
    N, HW, C = x_flat.shape
    Ch = w1.shape[1]
    assert HW == H * W
    assert W % 8 == 0, "halo-row BlockSpec needs W % 8 == 0"
    if th is None:
        th = _pick_row_tile(H, W, C, N, x_flat.dtype.itemsize)
    assert H % th == 0
    nj = H // th

    kernel = functools.partial(_residual_fused_kernel, th=th, W=W, slope=slope)

    # Rough per-step VMEM budget (double-buffered blocks + weights + temps).
    bp = x_flat.dtype.itemsize
    block_in = (th + 2) * W * C * bp
    block_out = th * W * C * bp
    weights = (C * Ch + Ch + 9 * Ch * C + C) * 4
    temps = ((th + 2) * W * (C + 7 * Ch) + 2 * th * W * C) * 4
    est = 2 * (block_in + block_out) + 2 * weights + temps
    vmem_limit = int(min(max(2 * est, 32 * 1024 * 1024), 64 * 1024 * 1024))

    in_specs = [
        # top halo image-row (clamped; zeroed in-kernel when j == 0)
        pl.BlockSpec((None, W, C),
                     lambda n, j: (n, jnp.maximum(j * th - 1, 0), 0)),
        # body rows [j*th, (j+1)*th)
        pl.BlockSpec((None, th * W, C), lambda n, j: (n, j, 0)),
        # bottom halo image-row (clamped; zeroed in-kernel when j == last)
        pl.BlockSpec((None, W, C),
                     lambda n, j: (n, jnp.minimum(j * th + th, H - 1), 0)),
        # weights / folded-BN biases (resident, constant index)
        pl.BlockSpec((C, Ch), lambda n, j: (0, 0)),
        pl.BlockSpec((1, Ch), lambda n, j: (0, 0)),
        pl.BlockSpec((3, 3 * Ch, C), lambda n, j: (0, 0, 0)),
        pl.BlockSpec((1, C), lambda n, j: (0, 0)),
    ]
    out_spec = pl.BlockSpec((None, th * W, C), lambda n, j: (n, j, 0))

    return pl.pallas_call(
        kernel,
        out_shape=jax.ShapeDtypeStruct((N, HW, C), x_flat.dtype),
        grid_spec=pltpu.PrefetchScalarGridSpec(
            num_scalar_prefetch=0,
            grid=(N, nj),
            in_specs=in_specs,
            out_specs=out_spec),
        compiler_params=pltpu.CompilerParams(
            dimension_semantics=("parallel", "parallel"),
            vmem_limit_bytes=vmem_limit),
    )(x_flat, x_flat, x_flat, w1, b1, w2cat, b2)


# ----------------------------------------------------------------------------
# Parameter setup + public forward wrapper (NCHW in / NCHW out).
# ----------------------------------------------------------------------------
def _fold_bn(gamma, beta, running_mean, running_var, eps=1e-5):
    scale = gamma / jnp.sqrt(running_var + eps)
    bias = beta - running_mean * scale
    return scale, bias


def init_residual_params(key, in_channel):
    c = in_channel
    ch = c // 2
    k = jax.random.split(key, 8)
    # PyTorch conv weight layouts: (out, in, kh, kw)
    w1 = jax.random.normal(k[0], (ch, c, 1, 1), jnp.float32) * 0.1
    w2 = jax.random.normal(k[1], (c, ch, 3, 3), jnp.float32) * 0.1
    bn1_gamma = 1.0 + 0.1 * jax.random.normal(k[2], (ch,), jnp.float32)
    bn1_beta = 0.1 * jax.random.normal(k[3], (ch,), jnp.float32)
    bn1_mean = 0.1 * jax.random.normal(k[4], (ch,), jnp.float32)
    bn1_var = jnp.abs(jax.random.normal(k[5], (ch,), jnp.float32)) + 0.5
    bn2_gamma = 1.0 + 0.1 * jax.random.normal(k[6], (c,), jnp.float32)
    bn2_beta = 0.1 * jax.random.normal(k[7], (c,), jnp.float32)
    bn2_mean = jnp.zeros((c,), jnp.float32)
    bn2_var = jnp.ones((c,), jnp.float32)
    return dict(
        w1=w1, w2=w2,
        bn1=(bn1_gamma, bn1_beta, bn1_mean, bn1_var),
        bn2=(bn2_gamma, bn2_beta, bn2_mean, bn2_var),
    )


@jax.jit
def residual_forward(x_nchw, params):
    """Residual block forward. Input/output are NCHW (PyTorch convention)."""
    x = jnp.transpose(x_nchw, (0, 2, 3, 1))            # -> NHWC
    N, H, W, C = x.shape
    Ch = C // 2

    s1, b1 = _fold_bn(*params["bn1"])
    s2, b2 = _fold_bn(*params["bn2"])

    # 1x1: (Ch, C, 1, 1) -> (C, Ch); fold BN1 scale into the output channel.
    w1 = jnp.transpose(params["w1"].reshape(Ch, C), (1, 0)) * s1[None, :]
    # 3x3: (C, Ch, 3, 3) -> HWIO (3, 3, Ch, C); fold BN2 scale; merge (kw, Ci)
    # into K = 3*Ch for the concatenated-tap matmul.
    w2 = jnp.transpose(params["w2"], (2, 3, 1, 0)) * s2[None, None, None, :]
    w2cat = w2.reshape(3, 3 * Ch, C)

    out_flat = _residual_fused(
        x.reshape(N, H * W, C), w1, b1.reshape(1, Ch),
        w2cat, b2.reshape(1, C), H=H, W=W)
    out = out_flat.reshape(N, H, W, C)
    return jnp.transpose(out, (0, 3, 1, 2))             # -> NCHW


# ----------------------------------------------------------------------------
# Pure-JAX reference (directly on PyTorch-layout weights) for self-checking.
# ----------------------------------------------------------------------------
def _reference_forward(x_nchw, params):
    def conv(x, w, pad):
        dn = jax.lax.conv_dimension_numbers(
            x.shape, w.shape, ('NCHW', 'OIHW', 'NCHW'))
        return jax.lax.conv_general_dilated(
            x, w, (1, 1), pad, dimension_numbers=dn,
            precision=jax.lax.Precision.HIGHEST)

    def bn(x, p):
        g, b, m, v = p
        s = g / jnp.sqrt(v + 1e-5)
        return x * s[None, :, None, None] + (b - m * s)[None, :, None, None]

    def lrelu(x):
        return jnp.where(x > 0, x, 0.1 * x)

    y = lrelu(bn(conv(x_nchw, params["w1"], 'VALID'), params["bn1"]))
    y = lrelu(bn(conv(y, params["w2"], 'SAME'), params["bn2"]))
    return y + x_nchw


if __name__ == "__main__":
    key = jax.random.PRNGKey(0)
    k_x, k_p = jax.random.split(key)

    N, C, H, W = 2, 8, 16, 16
    x = jax.random.normal(k_x, (N, C, H, W), jnp.float32)
    params = init_residual_params(k_p, C)

    out = residual_forward(x, params)
    jax.block_until_ready(out)

    assert out.shape == (N, C, H, W), out.shape
    assert bool(jnp.all(jnp.isfinite(out)))

    ref = _reference_forward(x, params)
    max_err = float(jnp.max(jnp.abs(out - ref)))
    assert max_err < 5e-2, f"mismatch vs reference: max abs err = {max_err}"

    print("KERNEL_OK")
</pallas_src>

<mosaic_0001>
module attributes {stable_mosaic.version = 11 : i64} {
  func.func @_residual_fused_kernel(%arg0: i32, %arg1: i32, %arg2: memref<1x16x8xf32, #tpu.memory_space<vmem>>, %arg3: memref<1x128x8xf32, #tpu.memory_space<vmem>>, %arg4: memref<1x16x8xf32, #tpu.memory_space<vmem>>, %arg5: memref<8x4xf32, #tpu.memory_space<vmem>>, %arg6: memref<1x4xf32, #tpu.memory_space<vmem>>, %arg7: memref<3x12x8xf32, #tpu.memory_space<vmem>>, %arg8: memref<1x8xf32, #tpu.memory_space<vmem>>, %arg9: memref<1x128x8xf32, #tpu.memory_space<vmem>>) attributes {dimension_semantics = [#tpu.dimension_semantics<parallel>, #tpu.dimension_semantics<parallel>], iteration_bounds = array<i64: 2, 2>, scalar_prefetch = 0 : i64, scratch_operands = 0 : i64, tpu.core_type = #tpu.core_type<tc>, window_params = [{transform_indices = @transform_0, window_bounds = array<i64: 1, 16, 8>}, {transform_indices = @transform_1, window_bounds = array<i64: 1, 128, 8>}, {transform_indices = @transform_2, window_bounds = array<i64: 1, 16, 8>}, {pipeline_mode = #tpu.pipeline_mode<synchronous>, transform_indices = @transform_3, window_bounds = array<i64: 8, 4>}, {pipeline_mode = #tpu.pipeline_mode<synchronous>, transform_indices = @transform_4, window_bounds = array<i64: 1, 4>}, {pipeline_mode = #tpu.pipeline_mode<synchronous>, transform_indices = @transform_5, window_bounds = array<i64: 3, 12, 8>}, {pipeline_mode = #tpu.pipeline_mode<synchronous>, transform_indices = @transform_6, window_bounds = array<i64: 1, 8>}, {transform_indices = @transform_7, window_bounds = array<i64: 1, 128, 8>}]} {
    %c0 = arith.constant 0 : index
    %c0_0 = arith.constant 0 : index
    %c0_1 = arith.constant 0 : index
    %0 = vector.load %arg2[%c0, %c0_0, %c0_1] : memref<1x16x8xf32, #tpu.memory_space<vmem>>, vector<1x16x8xf32>
    %1 = vector.shape_cast %0 : vector<1x16x8xf32> to vector<16x8xf32>
    %c0_2 = arith.constant 0 : index
    %c0_3 = arith.constant 0 : index
    %c0_4 = arith.constant 0 : index
    %2 = vector.load %arg3[%c0_2, %c0_3, %c0_4] : memref<1x128x8xf32, #tpu.memory_space<vmem>>, vector<1x128x8xf32>
    %3 = vector.shape_cast %2 : vector<1x128x8xf32> to vector<128x8xf32>
    %c0_5 = arith.constant 0 : index
    %c0_6 = arith.constant 0 : index
    %c0_7 = arith.constant 0 : index
    %4 = vector.load %arg4[%c0_5, %c0_6, %c0_7] : memref<1x16x8xf32, #tpu.memory_space<vmem>>, vector<1x16x8xf32>
    %5 = vector.shape_cast %4 : vector<1x16x8xf32> to vector<16x8xf32>
    %6 = tpu.concatenate %1, %3, %5 in 0 : vector<16x8xf32>, vector<128x8xf32>, vector<16x8xf32> -> vector<160x8xf32>
    %c0_8 = arith.constant 0 : index
    %c0_9 = arith.constant 0 : index
    %7 = vector.load %arg5[%c0_8, %c0_9] : memref<8x4xf32, #tpu.memory_space<vmem>>, vector<8x4xf32>
    %cst = arith.constant dense<0.000000e+00> : vector<160x4xf32>
    %8 = tpu.matmul %6, %7, %cst {dimension_numbers = #tpu.dot_dimension_numbers<[1], [0], [0], [1], [0, 0, 1, 1], [], []>} : vector<160x8xf32>, vector<8x4xf32>, vector<160x4xf32> -> vector<160x4xf32>
    %c0_10 = arith.constant 0 : index
    %c0_11 = arith.constant 0 : index
    %9 = vector.load %arg6[%c0_10, %c0_11] : memref<1x4xf32, #tpu.memory_space<vmem>>, vector<1x4xf32>
    %10 = vector.broadcast %9 : vector<1x4xf32> to vector<160x4xf32>
    %11 = arith.addf %8, %10 : vector<160x4xf32>
    %cst_12 = arith.constant 0.000000e+00 : f32
    %12 = vector.broadcast %cst_12 : f32 to vector<160x4xf32>
    %13 = arith.cmpf ogt, %11, %12 : vector<160x4xf32>
    %cst_13 = arith.constant 1.000000e-01 : f32
    %14 = vector.broadcast %cst_13 : f32 to vector<160x4xf32>
    %15 = arith.mulf %14, %11 : vector<160x4xf32>
    %16 = arith.select %13, %11, %15 : vector<160x4xi1>, vector<160x4xf32>
    %17 = tpu.iota {dimensions = array<i32: 0>} : vector<160x1xi32>
    %c16_i32 = arith.constant 16 : i32
    %18 = vector.broadcast %c16_i32 : i32 to vector<160x1xi32>
    %19 = arith.cmpi slt, %17, %18 : vector<160x1xi32>
    %c0_i32 = arith.constant 0 : i32
    %20 = arith.cmpi eq, %arg1, %c0_i32 : i32
    %21 = vector.broadcast %20 : i1 to vector<160x1xi1>
    %22 = arith.andi %19, %21 : vector<160x1xi1>
    %c144_i32 = arith.constant 144 : i32
    %23 = vector.broadcast %c144_i32 : i32 to vector<160x1xi32>
    %24 = arith.cmpi sge, %17, %23 : vector<160x1xi32>
    %c1_i32 = arith.constant 1 : i32
    %25 = arith.cmpi eq, %arg1, %c1_i32 : i32
    %26 = vector.broadcast %25 : i1 to vector<160x1xi1>
    %27 = arith.andi %24, %26 : vector<160x1xi1>
    %28 = arith.ori %22, %27 : vector<160x1xi1>
    %cst_14 = arith.constant 0.000000e+00 : f32
    %29 = vector.shape_cast %28 : vector<160x1xi1> to vector<160x1xi1>
    %30 = vector.broadcast %29 : vector<160x1xi1> to vector<160x4xi1>
    %31 = vector.broadcast %cst_14 : f32 to vector<160x4xf32>
    %32 = arith.select %30, %31, %16 : vector<160x4xi1>, vector<160x4xf32>
    %c16_i32_15 = arith.constant 16 : i32
    %c0_i32_16 = arith.constant 0 : i32
    %33 = arith.cmpi eq, %c16_i32_15, %c0_i32_16 : i32
    %c1_i32_17 = arith.constant 1 : i32
    %34 = arith.select %33, %c1_i32_17, %c16_i32_15 : i32
    %35 = vector.broadcast %34 : i32 to vector<160x1xi32>
    %36 = arith.remsi %17, %35 : vector<160x1xi32>
    %c0_i32_18 = arith.constant 0 : i32
    %37 = vector.broadcast %c0_i32_18 : i32 to vector<160x1xi32>
    %38 = arith.cmpi ne, %36, %37 : vector<160x1xi32>
    %c0_i32_19 = arith.constant 0 : i32
    %39 = vector.broadcast %c0_i32_19 : i32 to vector<160x1xi32>
    %40 = arith.cmpi slt, %36, %39 : vector<160x1xi32>
    %c0_i32_20 = arith.constant 0 : i32
    %41 = arith.cmpi slt, %34, %c0_i32_20 : i32
    %42 = vector.broadcast %41 : i1 to vector<160x1xi1>
    %43 = vector.broadcast %42 : vector<160x1xi1> to vector<160x1xi1>
    %44 = arith.xori %40, %43 : vector<160x1xi1>
    %45 = arith.andi %44, %38 : vector<160x1xi1>
    %46 = vector.broadcast %34 : i32 to vector<160x1xi32>
    %47 = arith.addi %36, %46 : vector<160x1xi32>
    %48 = arith.select %45, %47, %36 : vector<160x1xi1>, vector<160x1xi32>
    %cst_21 = arith.constant 0.000000e+00 : f32
    %49 = vector.broadcast %cst_21 : f32 to vector<1x4xf32>
    %50 = vector.extract_strided_slice %32 {offsets = [0, 0], sizes = [159, 4], strides = [1, 1]} : vector<160x4xf32> to vector<159x4xf32>
    %51 = tpu.concatenate %49, %50 in 0 : vector<1x4xf32>, vector<159x4xf32> -> vector<160x4xf32>
    %c0_i32_22 = arith.constant 0 : i32
    %52 = vector.broadcast %c0_i32_22 : i32 to vector<160x1xi32>
    %53 = arith.cmpi eq, %48, %52 : vector<160x1xi32>
    %cst_23 = arith.constant 0.000000e+00 : f32
    %54 = vector.shape_cast %53 : vector<160x1xi1> to vector<160x1xi1>
    %55 = vector.broadcast %54 : vector<160x1xi1> to vector<160x4xi1>
    %56 = vector.broadcast %cst_23 : f32 to vector<160x4xf32>
    %57 = arith.select %55, %56, %51 : vector<160x4xi1>, vector<160x4xf32>
    %58 = vector.extract_strided_slice %32 {offsets = [1, 0], sizes = [159, 4], strides = [1, 1]} : vector<160x4xf32> to vector<159x4xf32>
    %59 = tpu.concatenate %58, %49 in 0 : vector<159x4xf32>, vector<1x4xf32> -> vector<160x4xf32>
    %c15_i32 = arith.constant 15 : i32
    %60 = vector.broadcast %c15_i32 : i32 to vector<160x1xi32>
    %61 = arith.cmpi eq, %48, %60 : vector<160x1xi32>
    %cst_24 = arith.constant 0.000000e+00 : f32
    %62 = vector.shape_cast %61 : vector<160x1xi1> to vector<160x1xi1>
    %63 = vector.broadcast %62 : vector<160x1xi1> to vector<160x4xi1>
    %64 = vector.broadcast %cst_24 : f32 to vector<160x4xf32>
    %65 = arith.select %63, %64, %59 : vector<160x4xi1>, vector<160x4xf32>
    %66 = tpu.concatenate %57, %32, %65 in 1 : vector<160x4xf32>, vector<160x4xf32>, vector<160x4xf32> -> vector<160x12xf32>
    %cst_25 = arith.constant 0.000000e+00 : f32
    %67 = vector.broadcast %cst_25 : f32 to vector<128x8xf32>
    %68 = vector.extract_strided_slice %66 {offsets = [0, 0], sizes = [128, 12], strides = [1, 1]} : vector<160x12xf32> to vector<128x12xf32>
    %c0_26 = arith.constant 0 : index
    %c0_27 = arith.constant 0 : index
    %c0_28 = arith.constant 0 : index
    %69 = vector.load %arg7[%c0_26, %c0_27, %c0_28] : memref<3x12x8xf32, #tpu.memory_space<vmem>>, vector<1x12x8xf32>
    %70 = vector.shape_cast %69 : vector<1x12x8xf32> to vector<12x8xf32>
    %cst_29 = arith.constant dense<0.000000e+00> : vector<128x8xf32>
    %71 = tpu.matmul %68, %70, %cst_29 {dimension_numbers = #tpu.dot_dimension_numbers<[1], [0], [0], [1], [0, 0, 1, 1], [], []>} : vector<128x12xf32>, vector<12x8xf32>, vector<128x8xf32> -> vector<128x8xf32>
    %72 = arith.addf %67, %71 : vector<128x8xf32>
    %73 = vector.extract_strided_slice %66 {offsets = [16, 0], sizes = [128, 12], strides = [1, 1]} : vector<160x12xf32> to vector<128x12xf32>
    %c1 = arith.constant 1 : index
    %c0_30 = arith.constant 0 : index
    %c0_31 = arith.constant 0 : index
    %74 = vector.load %arg7[%c1, %c0_30, %c0_31] : memref<3x12x8xf32, #tpu.memory_space<vmem>>, vector<1x12x8xf32>
    %75 = vector.shape_cast %74 : vector<1x12x8xf32> to vector<12x8xf32>
    %cst_32 = arith.constant dense<0.000000e+00> : vector<128x8xf32>
    %76 = tpu.matmul %73, %75, %cst_32 {dimension_numbers = #tpu.dot_dimension_numbers<[1], [0], [0], [1], [0, 0, 1, 1], [], []>} : vector<128x12xf32>, vector<12x8xf32>, vector<128x8xf32> -> vector<128x8xf32>
    %77 = arith.addf %72, %76 : vector<128x8xf32>
    %78 = vector.extract_strided_slice %66 {offsets = [32, 0], sizes = [128, 12], strides = [1, 1]} : vector<160x12xf32> to vector<128x12xf32>
    %c2 = arith.constant 2 : index
    %c0_33 = arith.constant 0 : index
    %c0_34 = arith.constant 0 : index
    %79 = vector.load %arg7[%c2, %c0_33, %c0_34] : memref<3x12x8xf32, #tpu.memory_space<vmem>>, vector<1x12x8xf32>
    %80 = vector.shape_cast %79 : vector<1x12x8xf32> to vector<12x8xf32>
    %cst_35 = arith.constant dense<0.000000e+00> : vector<128x8xf32>
    %81 = tpu.matmul %78, %80, %cst_35 {dimension_numbers = #tpu.dot_dimension_numbers<[1], [0], [0], [1], [0, 0, 1, 1], [], []>} : vector<128x12xf32>, vector<12x8xf32>, vector<128x8xf32> -> vector<128x8xf32>
    %82 = arith.addf %77, %81 : vector<128x8xf32>
    %c0_36 = arith.constant 0 : index
    %c0_37 = arith.constant 0 : index
    %83 = vector.load %arg8[%c0_36, %c0_37] : memref<1x8xf32, #tpu.memory_space<vmem>>, vector<1x8xf32>
    %84 = vector.broadcast %83 : vector<1x8xf32> to vector<128x8xf32>
    %85 = arith.addf %82, %84 : vector<128x8xf32>
    %cst_38 = arith.constant 0.000000e+00 : f32
    %86 = vector.broadcast %cst_38 : f32 to vector<128x8xf32>
    %87 = arith.cmpf ogt, %85, %86 : vector<128x8xf32>
    %cst_39 = arith.constant 1.000000e-01 : f32
    %88 = vector.broadcast %cst_39 : f32 to vector<128x8xf32>
    %89 = arith.mulf %88, %85 : vector<128x8xf32>
    %90 = arith.select %87, %85, %89 : vector<128x8xi1>, vector<128x8xf32>
    %c0_40 = arith.constant 0 : index
    %c0_41 = arith.constant 0 : index
    %c0_42 = arith.constant 0 : index
    %91 = vector.load %arg3[%c0_40, %c0_41, %c0_42] : memref<1x128x8xf32, #tpu.memory_space<vmem>>, vector<1x128x8xf32>
    %92 = vector.shape_cast %91 : vector<1x128x8xf32> to vector<128x8xf32>
    %93 = arith.addf %90, %92 : vector<128x8xf32>
    %c0_43 = arith.constant 0 : index
    %c0_44 = arith.constant 0 : index
    %c0_45 = arith.constant 0 : index
    %94 = vector.load %arg9[%c0_43, %c0_44, %c0_45] : memref<1x128x8xf32, #tpu.memory_space<vmem>>, vector<1x128x8xf32>
    %95 = vector.shape_cast %94 : vector<1x128x8xf32> to vector<128x8xf32>
    %96 = vector.shape_cast %93 : vector<128x8xf32> to vector<1x128x8xf32>
    tpu.vector_store %arg9[%c0_43, %c0_44, %c0_45], %96 {strides = array<i32>} : memref<1x128x8xf32, #tpu.memory_space<vmem>>, vector<1x128x8xf32>,
    return
  }
  func.func @transform_0(%arg0: i32, %arg1: i32) -> (i32, i32, i32) {
    %c8_i32 = arith.constant 8 : i32
    %0 = arith.muli %arg1, %c8_i32 : i32
    %c1_i32 = arith.constant 1 : i32
    %1 = arith.subi %0, %c1_i32 : i32
    %c0_i32 = arith.constant 0 : i32
    %2 = arith.maxsi %1, %c0_i32 : i32
    %c0_i32_0 = arith.constant 0 : i32
    %c0_i32_1 = arith.constant 0 : i32
    return %arg0, %2, %c0_i32_0 : i32, i32, i32
  }
  func.func @transform_1(%arg0: i32, %arg1: i32) -> (i32, i32, i32) {
    %c0_i32 = arith.constant 0 : i32
    %c0_i32_0 = arith.constant 0 : i32
    return %arg0, %arg1, %c0_i32 : i32, i32, i32
  }
  func.func @transform_2(%arg0: i32, %arg1: i32) -> (i32, i32, i32) {
    %c8_i32 = arith.constant 8 : i32
    %0 = arith.muli %arg1, %c8_i32 : i32
    %c8_i32_0 = arith.constant 8 : i32
    %1 = arith.addi %0, %c8_i32_0 : i32
    %c15_i32 = arith.constant 15 : i32
    %2 = arith.minsi %1, %c15_i32 : i32
    %c0_i32 = arith.constant 0 : i32
    %c0_i32_1 = arith.constant 0 : i32
    return %arg0, %2, %c0_i32 : i32, i32, i32
  }
  func.func @transform_3(%arg0: i32, %arg1: i32) -> (i32, i32) {
    %c0_i32 = arith.constant 0 : i32
    %c0_i32_0 = arith.constant 0 : i32
    %c0_i32_1 = arith.constant 0 : i32
    return %c0_i32, %c0_i32_0 : i32, i32
  }
  func.func @transform_4(%arg0: i32, %arg1: i32) -> (i32, i32) {
    %c0_i32 = arith.constant 0 : i32
    %c0_i32_0 = arith.constant 0 : i32
    %c0_i32_1 = arith.constant 0 : i32
    return %c0_i32, %c0_i32_0 : i32, i32
  }
  func.func @transform_5(%arg0: i32, %arg1: i32) -> (i32, i32, i32) {
    %c0_i32 = arith.constant 0 : i32
    %c0_i32_0 = arith.constant 0 : i32
    %c0_i32_1 = arith.constant 0 : i32
    %c0_i32_2 = arith.constant 0 : i32
    return %c0_i32, %c0_i32_0, %c0_i32_1 : i32, i32, i32
  }
  func.func @transform_6(%arg0: i32, %arg1: i32) -> (i32, i32) {
    %c0_i32 = arith.constant 0 : i32
    %c0_i32_0 = arith.constant 0 : i32
    %c0_i32_1 = arith.constant 0 : i32
    return %c0_i32, %c0_i32_0 : i32, i32
  }
  func.func @transform_7(%arg0: i32, %arg1: i32) -> (i32, i32, i32) {
    %c0_i32 = arith.constant 0 : i32
    %c0_i32_0 = arith.constant 0 : i32
    return %arg0, %arg1, %c0_i32 : i32, i32, i32
  }
}

</mosaic_0001>

<llo_original>
// kernel: residual_forward.1
$region0: #{residual_forward.1}
  #allocation0 [shape = 'u32[]', space=smem, size = 0x4, offset = 0x4, fixed_abs, tag = 'smem constant byte address 0x4 - core index']
  #allocation1 [shape = 'u32[144,128]{1,0:T(1,128)}', space=vmem, size = 0x12000, scoped, tag = 'internal scratch']
  %s0 = inlined_call_operand.vmem [shape: f32[2,256,8], index: 0, kind: input, shape index: {}, may-alias: {0,1,2}]
  %s1 = inlined_call_operand.vmem [shape: f32[2,256,8], index: 1, kind: input, shape index: {}, may-alias: {0,1,2}]
  %s2 = inlined_call_operand.vmem [shape: f32[2,256,8], index: 2, kind: input, shape index: {}, may-alias: {0,1,2}]
  %s3 = inlined_call_operand.vmem [shape: f32[8,4], index: 3, kind: input, shape index: {}]
  %s4 = inlined_call_operand.vmem [shape: f32[1,4], index: 4, kind: input, shape index: {}]
  %s5 = inlined_call_operand.vmem [shape: f32[3,12,8], index: 5, kind: input, shape index: {}]
  %s6 = inlined_call_operand.vmem [shape: f32[1,8], index: 6, kind: input, shape index: {}]
  %s7 = inlined_call_operand.vmem [shape: f32[2,256,8], index: 7, kind: output, shape index: {}]
  %s8 = sld [smem:[#allocation0]]
  $region61: #{residual_forward.1} parent=0
    _
  %s10 = ssub.s32 1, %s8
  %s11 = scalar_select 0, %s10, %s8
  loop: start=0, step=1, limit=6
  $region2: #{residual_forward.1} parent=0 // loop_pre_header
    _
  $region3: #{residual_forward.1} parent=0 // loop_header
    %s13 = sphi 0, %s17
    %p14 = scmp.ge.s32.totalorder %s13, 6
    %s20 = sphi 0, %s32
    %s21 = sphi 0, %s28
    %s22 = sphi 0, %s20
    %s23 = sphi 0, %s21
    %s24 = sphi 0, %s22
    %s25 = sphi 0, %s23
    %s45 = sphi 0, %s47
    %s48 = sphi 0, %s45
    %s49 = sphi 0, %s48
    %s65 = sphi 0, %s49
    %s73 = sphi 0, %s75
    %s76 = sphi 0, %s73
    %s77 = sphi 0, %s76
    %s93 = sphi 0, %s77
    %s109 = sphi 0, %s111
    %s112 = sphi 0, %s109
    %s113 = sphi 0, %s112
    %s129 = sphi 0, %s113
    %s133 = sphi 0, %s133
    %s135 = sphi 0, %s133
    %s136 = sphi 0, %s135
    %s150 = sphi 0, %s136
    %s154 = sphi 0, %s154
    %s156 = sphi 0, %s154
    %s157 = sphi 0, %s156
    %s171 = sphi 0, %s157
    %s175 = sphi 0, %s175
    %s177 = sphi 0, %s175
    %s178 = sphi 0, %s177
    %s192 = sphi 0, %s178
    %s196 = sphi 0, %s196
    %s198 = sphi 0, %s196
    %s199 = sphi 0, %s198
    %s213 = sphi 0, %s199
    %s221 = sphi 0, %s223
    %s224 = sphi 0, %s221
    %s225 = sphi 0, %s224
    %s241 = sphi 0, %s225
  $region4: #{residual_forward.1} parent=0 // loop_header_branch
    %16 = sbr.rel (%p14) target = $region8
  $region5: #{residual_forward.1} parent=0 // loop_body
    %s18 = ssub.s32 %s13, 1
    %s19 = ssub.s32 %s13, 2
    %s26 = sadd.s32 1, %s21
    %p27 = scmp.ge.s32.totalorder %s26, 2
    %s28 = scalar_select %p27, 0, %s26
    %s29 = sadd.s32 1, %s20
    %s30 = scalar_select %p27, %s29, %s20
    %p31 = scmp.ge.s32.totalorder %s30, 2
    %s32 = scalar_select %p31, 0, %s30
    %s33 = smul.u32 %s21, 8
    %s34 = ssub.s32 %s33, 1
    %p35 = scmp.gt.s32.totalorder %s34, 0
    %s36 = scalar_select %p35, %s34, 0
    %s37 = smul.u32 %s28, 8
    %s38 = ssub.s32 %s37, 1
    %p39 = scmp.gt.s32.totalorder %s38, 0
    %s40 = scalar_select %p39, %s38, 0
    %s41 = ssub.s32 %s20, %s32
    %s42 = ssub.s32 %s36, %s40
    %s43 = sor.u32 %s41, %s42
    %p44 = scmp.eq.s32.totalorder %s43, 0
    %s46 = sadd.s32 %s45, 1
    %s47 = scalar_select %p44, %s45, %s46
    %p50 = pneg %p44
    %p51 = scmp.eq.s32.totalorder %s13, 3
    %p52 = por %p50, %p51
    %p53 = scmp.ne.s32.totalorder %s45, %s48
    %p54 = scmp.eq.s32.totalorder %s13, 0
    %p55 = por %p53, %p54
    %p56 = scmp.ne.s32.totalorder %s45, %s48
    %p57 = scmp.eq.s32.totalorder %s18, 3
    %p58 = por %p56, %p57
    %p59 = scmp.ne.s32.totalorder %s48, %s49
    %p60 = scmp.eq.s32.totalorder %s18, 0
    %p61 = por %p59, %p60
    %p62 = scmp.ne.s32.totalorder %s48, %s49
    %p63 = scmp.eq.s32.totalorder %s19, 3
    %p64 = por %p62, %p63
    %p66 = scmp.ne.s32.totalorder %s49, %s65
    %p67 = scmp.eq.s32.totalorder %s19, 0
    %p68 = por %p66, %p67
    %s69 = ssub.s32 %s20, %s32
    %s70 = ssub.s32 %s21, %s28
    %s71 = sor.u32 %s69, %s70
    %p72 = scmp.eq.s32.totalorder %s71, 0
    %s74 = sadd.s32 %s73, 1
    %s75 = scalar_select %p72, %s73, %s74
    %p78 = pneg %p72
    %p79 = scmp.eq.s32.totalorder %s13, 3
    %p80 = por %p78, %p79
    %p81 = scmp.ne.s32.totalorder %s73, %s76
    %p82 = scmp.eq.s32.totalorder %s13, 0
    %p83 = por %p81, %p82
    %p84 = scmp.ne.s32.totalorder %s73, %s76
    %p85 = scmp.eq.s32.totalorder %s18, 3
    %p86 = por %p84, %p85
    %p87 = scmp.ne.s32.totalorder %s76, %s77
    %p88 = scmp.eq.s32.totalorder %s18, 0
    %p89 = por %p87, %p88
    %p90 = scmp.ne.s32.totalorder %s76, %s77
    %p91 = scmp.eq.s32.totalorder %s19, 3
    %p92 = por %p90, %p91
    %p94 = scmp.ne.s32.totalorder %s77, %s93
    %p95 = scmp.eq.s32.totalorder %s19, 0
    %p96 = por %p94, %p95
    %s97 = smul.u32 %s21, 8
    %s98 = sadd.s32 %s97, 8
    %p99 = scmp.lt.s32.totalorder %s98, 15
    %s100 = scalar_select %p99, %s98, 15
    %s101 = smul.u32 %s28, 8
    %s102 = sadd.s32 %s101, 8
    %p103 = scmp.lt.s32.totalorder %s102, 15
    %s104 = scalar_select %p103, %s102, 15
    %s105 = ssub.s32 %s20, %s32
    %s106 = ssub.s32 %s100, %s104
    %s107 = sor.u32 %s105, %s106
    %p108 = scmp.eq.s32.totalorder %s107, 0
    %s110 = sadd.s32 %s109, 1
    %s111 = scalar_select %p108, %s109, %s110
    %p114 = pneg %p108
    %p115 = scmp.eq.s32.totalorder %s13, 3
    %p116 = por %p114, %p115
    %p117 = scmp.ne.s32.totalorder %s109, %s112
    %p118 = scmp.eq.s32.totalorder %s13, 0
    %p119 = por %p117, %p118
    %p120 = scmp.ne.s32.totalorder %s109, %s112
    %p121 = scmp.eq.s32.totalorder %s18, 3
    %p122 = por %p120, %p121
    %p123 = scmp.ne.s32.totalorder %s112, %s113
    %p124 = scmp.eq.s32.totalorder %s18, 0
    %p125 = por %p123, %p124
    %p126 = scmp.ne.s32.totalorder %s112, %s113
    %p127 = scmp.eq.s32.totalorder %s19, 3
    %p128 = por %p126, %p127
    %p130 = scmp.ne.s32.totalorder %s113, %s129
    %p131 = scmp.eq.s32.totalorder %s19, 0
    %p132 = por %p130, %p131
    %s134 = sadd.s32 %s133, 1
    %p137 = scmp.eq.s32.totalorder %s13, 3
    %p138 = scmp.ne.s32.totalorder %s133, %s135
    %p139 = scmp.eq.s32.totalorder %s13, 0
    %p140 = por %p138, %p139
    %p141 = scmp.ne.s32.totalorder %s133, %s135
    %p142 = scmp.eq.s32.totalorder %s18, 3
    %p143 = por %p141, %p142
    %p144 = scmp.ne.s32.totalorder %s135, %s136
    %p145 = scmp.eq.s32.totalorder %s18, 0
    %p146 = por %p144, %p145
    %p147 = scmp.ne.s32.totalorder %s135, %s136
    %p148 = scmp.eq.s32.totalorder %s19, 3
    %p149 = por %p147, %p148
    %p151 = scmp.ne.s32.totalorder %s136, %s150
    %p152 = scmp.eq.s32.totalorder %s19, 0
    %p153 = por %p151, %p152
    %s155 = sadd.s32 %s154, 1
    %p158 = scmp.eq.s32.totalorder %s13, 3
    %p159 = scmp.ne.s32.totalorder %s154, %s156
    %p160 = scmp.eq.s32.totalorder %s13, 0
    %p161 = por %p159, %p160
    %p162 = scmp.ne.s32.totalorder %s154, %s156
    %p163 = scmp.eq.s32.totalorder %s18, 3
    %p164 = por %p162, %p163
    %p165 = scmp.ne.s32.totalorder %s156, %s157
    %p166 = scmp.eq.s32.totalorder %s18, 0
    %p167 = por %p165, %p166
    %p168 = scmp.ne.s32.totalorder %s156, %s157
    %p169 = scmp.eq.s32.totalorder %s19, 3
    %p170 = por %p168, %p169
    %p172 = scmp.ne.s32.totalorder %s157, %s171
    %p173 = scmp.eq.s32.totalorder %s19, 0
    %p174 = por %p172, %p173
    %s176 = sadd.s32 %s175, 1
    %p179 = scmp.eq.s32.totalorder %s13, 3
    %p180 = scmp.ne.s32.totalorder %s175, %s177
    %p181 = scmp.eq.s32.totalorder %s13, 0
    %p182 = por %p180, %p181
    %p183 = scmp.ne.s32.totalorder %s175, %s177
    %p184 = scmp.eq.s32.totalorder %s18, 3
    %p185 = por %p183, %p184
    %p186 = scmp.ne.s32.totalorder %s177, %s178
    %p187 = scmp.eq.s32.totalorder %s18, 0
    %p188 = por %p186, %p187
    %p189 = scmp.ne.s32.totalorder %s177, %s178
    %p190 = scmp.eq.s32.totalorder %s19, 3
    %p191 = por %p189, %p190
    %p193 = scmp.ne.s32.totalorder %s178, %s192
    %p194 = scmp.eq.s32.totalorder %s19, 0
    %p195 = por %p193, %p194
    %s197 = sadd.s32 %s196, 1
    %p200 = scmp.eq.s32.totalorder %s13, 3
    %p201 = scmp.ne.s32.totalorder %s196, %s198
    %p202 = scmp.eq.s32.totalorder %s13, 0
    %p203 = por %p201, %p202
    %p204 = scmp.ne.s32.totalorder %s196, %s198
    %p205 = scmp.eq.s32.totalorder %s18, 3
    %p206 = por %p204, %p205
    %p207 = scmp.ne.s32.totalorder %s198, %s199
    %p208 = scmp.eq.s32.totalorder %s18, 0
    %p209 = por %p207, %p208
    %p210 = scmp.ne.s32.totalorder %s198, %s199
    %p211 = scmp.eq.s32.totalorder %s19, 3
    %p212 = por %p210, %p211
    %p214 = scmp.ne.s32.totalorder %s199, %s213
    %p215 = scmp.eq.s32.totalorder %s19, 0
    %p216 = por %p214, %p215
    %s217 = ssub.s32 %s20, %s32
    %s218 = ssub.s32 %s21, %s28
    %s219 = sor.u32 %s217, %s218
    %p220 = scmp.eq.s32.totalorder %s219, 0
    %s222 = sadd.s32 %s221, 1
    %s223 = scalar_select %p220, %s221, %s222
    %p226 = pneg %p220
    %p227 = scmp.eq.s32.totalorder %s13, 3
    %p228 = por %p226, %p227
    %p229 = scmp.ne.s32.totalorder %s221, %s224
    %p230 = scmp.eq.s32.totalorder %s13, 0
    %p231 = por %p229, %p230
    %p232 = scmp.ne.s32.totalorder %s221, %s224
    %p233 = scmp.eq.s32.totalorder %s18, 3
    %p234 = por %p232, %p233
    %p235 = scmp.ne.s32.totalorder %s224, %s225
    %p236 = scmp.eq.s32.totalorder %s18, 0
    %p237 = por %p235, %p236
    %p238 = scmp.ne.s32.totalorder %s224, %s225
    %p239 = scmp.eq.s32.totalorder %s19, 3
    %p240 = por %p238, %p239
    %p242 = scmp.ne.s32.totalorder %s225, %s241
    %p243 = scmp.eq.s32.totalorder %s19, 0
    %p244 = por %p242, %p243
    %p245 = scmp.le.s32.totalorder 1, %s13
    %p246 = scmp.lt.s32.totalorder %s13, 5
    %p247 = pnand %p245, %p246
    %p248 = pneg %p247
    // Predicated region
    $region9: #{residual_forward.1} parent=5 // pred_check
      _
    $region10: #{residual_forward.1} parent=5 // pred_check_branch
      %250 = sbr.rel (%p247) target = $region12
    $region11: #{residual_forward.1} parent=5 // pred_region
      %s251 = ssub.s32 %s13, 1
      // Predicated region
      $region13: #{residual_forward.1} parent=11 // pred_check
        %p252 = pneg %p146
      $region14: #{residual_forward.1} parent=11 // pred_check_branch
        %254 = sbr.rel (%p252) target = $region16
      $region15: #{residual_forward.1} parent=11 // pred_region
        _
      $region16: #{residual_forward.1} parent=11 // pred_fallthru
        _
      // Predicated region
      $region17: #{residual_forward.1} parent=11 // pred_check
        %p255 = pneg %p167
      $region18: #{residual_forward.1} parent=11 // pred_check_branch
        %257 = sbr.rel (%p255) target = $region20
      $region19: #{residual_forward.1} parent=11 // pred_region
        _
      $region20: #{residual_forward.1} parent=11 // pred_fallthru
        _
      // Predicated region
      $region21: #{residual_forward.1} parent=11 // pred_check
        %p258 = pneg %p188
      $region22: #{residual_forward.1} parent=11 // pred_check_branch
        %260 = sbr.rel (%p258) target = $region24
      $region23: #{residual_forward.1} parent=11 // pred_region
        _
      $region24: #{residual_forward.1} parent=11 // pred_fallthru
        _
      // Predicated region
      $region25: #{residual_forward.1} parent=11 // pred_check
        %p261 = pneg %p209
      $region26: #{residual_forward.1} parent=11 // pred_check_branch
        %263 = sbr.rel (%p261) target = $region28
      $region27: #{residual_forward.1} parent=11 // pred_region
        _
      $region28: #{residual_forward.1} parent=11 // pred_fallthru
        _
    $region12: #{residual_forward.1} parent=5 // pred_fallthru
      _
    %p264 = scmp.lt.s32.totalorder %s13, 4
    // Predicated region
    $region29: #{residual_forward.1} parent=5 // pred_check
      %p265 = pneg %p264
    $region30: #{residual_forward.1} parent=5 // pred_check_branch
      %267 = sbr.rel (%p265) target = $region32
    $region31: #{residual_forward.1} parent=5 // pred_region
      // Predicated region
      $region33: #{residual_forward.1} parent=31 // pred_check
        %p268 = pneg %p55
      $region34: #{residual_forward.1} parent=31 // pred_check_branch
        %270 = sbr.rel (%p268) target = $region36
      $region35: #{residual_forward.1} parent=31 // pred_region
        %s271 = smul.u32 %s21, 8
        %s272 = ssub.s32 %s271, 1
        %p273 = scmp.gt.s32.totalorder %s272, 0
        %s274 = scalar_select %p273, %s272, 0
        %s275 = smul.u32 2, %s274
        %p276 = scmp.lt.s32.totalorder %s20, 1
        %s277 = scalar_select %p276, %s20, 1
        %p278 = scmp.lt.s32.totalorder %s275, 31
        %s279 = scalar_select %p278, %s275, 31
        %s280 = smul.addr %s277, 32
        %s281 = sadd.s32 %s279, %s280
        %s282 = smul.addr %s281, 8
        %s283 = scalar_lea.vmem %s0, %s282
        %s284 = smul.u32 %s21, 8
        %s285 = ssub.s32 %s284, 1
        %p286 = scmp.gt.s32.totalorder %s285, 0
        %s287 = scalar_select %p286, %s285, 0
        %s288 = smul.u32 2, %s287
      $region36: #{residual_forward.1} parent=31 // pred_fallthru
        _
      // Predicated region
      $region37: #{residual_forward.1} parent=31 // pred_check
        %p289 = pneg %p83
      $region38: #{residual_forward.1} parent=31 // pred_check_branch
        %291 = sbr.rel (%p289) target = $region40
      $region39: #{residual_forward.1} parent=31 // pred_region
        %s292 = smul.u32 16, %s21
        %p293 = scmp.lt.s32.totalorder %s20, 1
        %s294 = scalar_select %p293, %s20, 1
        %p295 = scmp.lt.s32.totalorder %s292, 31
        %s296 = scalar_select %p295, %s292, 31
        %s297 = smul.addr %s294, 32
        %s298 = sadd.s32 %s296, %s297
        %s299 = smul.addr %s298, 8
        %s300 = scalar_lea.vmem %s1, %s299
        %s301 = smul.u32 16, %s21
      $region40: #{residual_forward.1} parent=31 // pred_fallthru
        _
      // Predicated region
      $region41: #{residual_forward.1} parent=31 // pred_check
        %p302 = pneg %p119
      $region42: #{residual_forward.1} parent=31 // pred_check_branch
        %304 = sbr.rel (%p302) target = $region44
      $region43: #{residual_forward.1} parent=31 // pred_region
        %s305 = smul.u32 %s21, 8
        %s306 = sadd.s32 %s305, 8
        %p307 = scmp.lt.s32.totalorder %s306, 15
        %s308 = scalar_select %p307, %s306, 15
        %s309 = smul.u32 2, %s308
        %p310 = scmp.lt.s32.totalorder %s20, 1
        %s311 = scalar_select %p310, %s20, 1
        %p312 = scmp.lt.s32.totalorder %s309, 31
        %s313 = scalar_select %p312, %s309, 31
        %s314 = smul.addr %s311, 32
        %s315 = sadd.s32 %s313, %s314
        %s316 = smul.addr %s315, 8
        %s317 = scalar_lea.vmem %s2, %s316
        %s318 = smul.u32 %s21, 8
        %s319 = sadd.s32 %s318, 8
        %p320 = scmp.lt.s32.totalorder %s319, 15
        %s321 = scalar_select %p320, %s319, 15
        %s322 = smul.u32 2, %s321
      $region44: #{residual_forward.1} parent=31 // pred_fallthru
        _
    $region32: #{residual_forward.1} parent=5 // pred_fallthru
      _
    %p323 = scmp.le.s32.totalorder 1, %s13
    %p324 = scmp.lt.s32.totalorder %s13, 5
    %p325 = pnand %p323, %p324
    %p326 = pneg %p325
    // Predicated region
    $region45: #{residual_forward.1} parent=5 // pred_check
      _
    $region46: #{residual_forward.1} parent=5 // pred_check_branch
      %328 = sbr.rel (%p325) target = $region48
    $region47: #{residual_forward.1} parent=5 // pred_region
      %s329 = ssub.s32 %s13, 1
      %s330 = smul.u32 %s23, 8
      %s331 = ssub.s32 %s330, 1
      %p332 = scmp.gt.s32.totalorder %s331, 0
      %s333 = scalar_select %p332, %s331, 0
      %s334 = smul.u32 2, %s333
      %p335 = scmp.lt.s32.totalorder %s22, 1
      %s336 = scalar_select %p335, %s22, 1
      %p337 = scmp.lt.s32.totalorder %s334, 31
      %s338 = scalar_select %p337, %s334, 31
      %s339 = smul.addr %s336, 32
      %s340 = sadd.s32 %s338, %s339
      %s341 = smul.addr %s340, 8
      %s342 = scalar_lea.vmem %s0, %s341
      %p343 = pneg %p61
      %p344 = pneg %p58
      %s345 = smul.u32 16, %s23
      %p346 = scmp.lt.s32.totalorder %s22, 1
      %s347 = scalar_select %p346, %s22, 1
      %p348 = scmp.lt.s32.totalorder %s345, 31
      %s349 = scalar_select %p348, %s345, 31
      %s350 = smul.addr %s347, 32
      %s351 = sadd.s32 %s349, %s350
      %s352 = smul.addr %s351, 8
      %s353 = scalar_lea.vmem %s1, %s352
      %p354 = pneg %p89
      %p355 = pneg %p86
      %s356 = smul.u32 %s23, 8
      %s357 = sadd.s32 %s356, 8
      %p358 = scmp.lt.s32.totalorder %s357, 15
      %s359 = scalar_select %p358, %s357, 15
      %s360 = smul.u32 2, %s359
      %p361 = scmp.lt.s32.totalorder %s22, 1
      %s362 = scalar_select %p361, %s22, 1
      %p363 = scmp.lt.s32.totalorder %s360, 31
      %s364 = scalar_select %p363, %s360, 31
      %s365 = smul.addr %s362, 32
      %s366 = sadd.s32 %s364, %s365
      %s367 = smul.addr %s366, 8
      %s368 = scalar_lea.vmem %s2, %s367
      %p369 = pneg %p125
      %p370 = pneg %p122
      %p371 = pneg %p146
      %p372 = pneg %p143
      %p373 = pneg %p167
      %p374 = pneg %p164
      %p375 = pneg %p188
      %p376 = pneg %p185
      %p377 = pneg %p209
      %p378 = pneg %p206
      %p379 = pneg %p237
      %p380 = pneg %p234
      %s381 = smul.u32 16, %s23
      %p382 = scmp.lt.s32.totalorder %s22, 1
      %s383 = scalar_select %p382, %s22, 1
      %p384 = scmp.lt.s32.totalorder %s381, 31
      %s385 = scalar_select %p384, %s381, 31
      %s386 = smul.addr %s383, 32
      %s387 = sadd.s32 %s385, %s386
      %s388 = smul.addr %s387, 8
      %s389 = scalar_lea.vmem %s7, %s388
      %s390 = smul.u32 %s23, 8
      %s391 = ssub.s32 %s390, 1
      %p392 = scmp.gt.s32.totalorder %s391, 0
      %s393 = scalar_select %p392, %s391, 0
      %s394 = smul.u32 2, %s393
      %p395 = scmp.lt.s32.totalorder %s22, 1
      %s396 = scalar_select %p395, %s22, 1
      %p397 = scmp.lt.s32.totalorder %s394, 31
      %s398 = scalar_select %p397, %s394, 31
      %s399 = smul.addr %s396, 32
      %s400 = sadd.s32 %s398, %s399
      %s401 = smul.addr %s400, 8
      %s402 = scalar_lea.vmem %s0, %s401
      %s403 = smul.u32 %s23, 8
      %s404 = ssub.s32 %s403, 1
      %p405 = scmp.gt.s32.totalorder %s404, 0
      %s406 = scalar_select %p405, %s404, 0
      %s407 = smul.u32 2, %s406
      %s408 = smul.u32 16, %s23
      %p409 = scmp.lt.s32.totalorder %s22, 1
      %s410 = scalar_select %p409, %s22, 1
      %p411 = scmp.lt.s32.totalorder %s408, 31
      %s412 = scalar_select %p411, %s408, 31
      %s413 = smul.addr %s410, 32
      %s414 = sadd.s32 %s412, %s413
      %s415 = smul.addr %s414, 8
      %s416 = scalar_lea.vmem %s1, %s415
      %s417 = smul.u32 16, %s23
      %s418 = smul.u32 %s23, 8
      %s419 = sadd.s32 %s418, 8
      %p420 = scmp.lt.s32.totalorder %s419, 15
      %s421 = scalar_select %p420, %s419, 15
      %s422 = smul.u32 2, %s421
      %p423 = scmp.lt.s32.totalorder %s22, 1
      %s424 = scalar_select %p423, %s22, 1
      %p425 = scmp.lt.s32.totalorder %s422, 31
      %s426 = scalar_select %p425, %s422, 31
      %s427 = smul.addr %s424, 32
      %s428 = sadd.s32 %s426, %s427
      %s429 = smul.addr %s428, 8
      %s430 = scalar_lea.vmem %s2, %s429
      %s431 = smul.u32 %s23, 8
      %s432 = sadd.s32 %s431, 8
      %p433 = scmp.lt.s32.totalorder %s432, 15
      %s434 = scalar_select %p433, %s432, 15
      %s435 = smul.u32 2, %s434
      %s436 = smul.u32 16, %s23
      %p437 = scmp.lt.s32.totalorder %s22, 1
      %s438 = scalar_select %p437, %s22, 1
      %p439 = scmp.lt.s32.totalorder %s436, 31
      %s440 = scalar_select %p439, %s436, 31
      %s441 = smul.addr %s438, 32
      %s442 = sadd.s32 %s440, %s441
      %s443 = smul.addr %s442, 8
      %s444 = scalar_lea.vmem %s7, %s443
      %s445 = smul.u32 16, %s23
      %v446 = vld [vmem:[%s402] sm:$0xff]
      %v447 = vld [vmem:[%s402 + $0x8] sm:$0xff]
      %v448 = vld [vmem:[%s416] sm:$0xff]
      %v449 = vld [vmem:[%s416 + $0x8] sm:$0xff]
      %v450 = vld [vmem:[%s416 + $0x10] sm:$0xff]
      %v451 = vld [vmem:[%s416 + $0x18] sm:$0xff]
      %v452 = vld [vmem:[%s416 + $0x20] sm:$0xff]
      %v453 = vld [vmem:[%s416 + $0x28] sm:$0xff]
      %v454 = vld [vmem:[%s416 + $0x30] sm:$0xff]
      %v455 = vld [vmem:[%s416 + $0x38] sm:$0xff]
      %v456 = vld [vmem:[%s416 + $0x40] sm:$0xff]
      %v457 = vld [vmem:[%s416 + $0x48] sm:$0xff]
      %v458 = vld [vmem:[%s416 + $0x50] sm:$0xff]
      %v459 = vld [vmem:[%s416 + $0x58] sm:$0xff]
      %v460 = vld [vmem:[%s416 + $0x60] sm:$0xff]
      %v461 = vld [vmem:[%s416 + $0x68] sm:$0xff]
      %v462 = vld [vmem:[%s416 + $0x70] sm:$0xff]
      %v463 = vld [vmem:[%s416 + $0x78] sm:$0xff]
      %v464 = vld [vmem:[%s430] sm:$0xff]
      %v465 = vld [vmem:[%s430 + $0x8] sm:$0xff]
      %v466 = vld [vmem:[%s3] sm:$0xff]
      %v467 = vld [vmem:[%s4] sm:$0x1]
      %v469 = vlaneseq
      %v470 = vshrl.u32 %v469, 7
      %v471 = vsub.s32 0, %v470
      %v472 = vrot.slane %v467, %v471
      %vm474 = vcmask 64512
      %v476 = vsel %vm474, %v446, 0
      %v479 = vsel %vm474, %v447, 0
      %v482 = vsel %vm474, %v448, 0
      %v485 = vsel %vm474, %v449, 0
      %v488 = vsel %vm474, %v450, 0
      %v491 = vsel %vm474, %v451, 0
      %v494 = vsel %vm474, %v452, 0
      %v497 = vsel %vm474, %v453, 0
      %v500 = vsel %vm474, %v454, 0
      %v503 = vsel %vm474, %v455, 0
      %v506 = vsel %vm474, %v456, 0
      %v509 = vsel %vm474, %v457, 0
      %v512 = vsel %vm474, %v458, 0
      %v515 = vsel %vm474, %v459, 0
      %v518 = vsel %vm474, %v460, 0
      %v521 = vsel %vm474, %v461, 0
      %v524 = vsel %vm474, %v462, 0
      %v527 = vsel %vm474, %v463, 0
      %v530 = vsel %vm474, %v464, 0
      %v533 = vsel %vm474, %v465, 0
      %535 = vmatprep.subr.mxu0 0.0
      %536 = vmatpush1.msra.mxu0 0.0
      %537 = vmatprep.subr.mxu0 0.0
      %538 = vmatpush1.msra.mxu0 0.0
      %539 = vmatprep.subr.mxu0 0.0
      %540 = vmatpush1.msra.mxu0 0.0
      %541 = vmatprep.subr.mxu0 0.0
      %542 = vmatpush1.msra.mxu0 0.0
      %543 = vmatprep.subr.mxu0 0.0
      %544 = vmatpush1.msra.mxu0 0.0
      %545 = vmatprep.subr.mxu0 0.0
      %546 = vmatpush1.msra.mxu0 0.0
      %547 = vmatprep.subr.mxu0 0.0
      %548 = vmatpush1.msra.mxu0 0.0
      %549 = vmatprep.subr.mxu0 0.0
      %550 = vmatpush1.msra.mxu0 0.0
      %551 = vmatprep.subr.mxu0 0.0
      %552 = vmatpush1.msra.mxu0 0.0
      %553 = vmatprep.subr.mxu0 0.0
      %554 = vmatpush1.msra.mxu0 0.0
      %555 = vmatprep.subr.mxu0 0.0
      %556 = vmatpush1.msra.mxu0 0.0
      %557 = vmatprep.subr.mxu0 0.0
      %558 = vmatpush1.msra.mxu0 0.0
      %559 = vmatprep.subr.mxu0 0.0
      %560 = vmatpush1.msra.mxu0 0.0
      %561 = vmatprep.subr.mxu0 0.0
      %562 = vmatpush1.msra.mxu0 0.0
      %563 = vmatprep.subr.mxu0 0.0
      %564 = vmatpush1.msra.mxu0 0.0
      %565 = vmatprep.subr.mxu0 0.0
      %566 = vmatpush1.msra.mxu0 %v466
      %567 = vmatprep.subr.mxu0 0.0
      %568 = vmatpush2.msra.mxu0 0.0
      %569 = vmatprep.subr.mxu0 0.0
      %570 = vmatpush2.msra.mxu0 0.0
      %571 = vmatprep.subr.mxu0 0.0
      %572 = vmatpush2.msra.mxu0 0.0
      %573 = vmatprep.subr.mxu0 0.0
      %574 = vmatpush2.msra.mxu0 0.0
      %575 = vmatprep.subr.mxu0 0.0
      %576 = vmatpush2.msra.mxu0 0.0
      %577 = vmatprep.subr.mxu0 0.0
      %578 = vmatpush2.msra.mxu0 0.0
      %579 = vmatprep.subr.mxu0 0.0
      %580 = vmatpush2.msra.mxu0 0.0
      %581 = vmatprep.subr.mxu0 0.0
      %582 = vmatpush2.msra.mxu0 0.0
      %583 = vmatprep.subr.mxu0 0.0
      %584 = vmatpush2.msra.mxu0 0.0
      %585 = vmatprep.subr.mxu0 0.0
      %586 = vmatpush2.msra.mxu0 0.0
      %587 = vmatprep.subr.mxu0 0.0
      %588 = vmatpush2.msra.mxu0 0.0
      %589 = vmatprep.subr.mxu0 0.0
      %590 = vmatpush2.msra.mxu0 0.0
      %591 = vmatprep.subr.mxu0 0.0
      %592 = vmatpush2.msra.mxu0 0.0
      %593 = vmatprep.subr.mxu0 0.0
      %594 = vmatpush2.msra.mxu0 0.0
      %595 = vmatprep.subr.mxu0 0.0
      %596 = vmatpush2.msra.mxu0 0.0
      %597 = vmatprep.subr.mxu0 0.0
      %598 = vmatpush2.msra.mxu0 0.0
      %599 = vmatprep.mubr.f32.mxu0 0.0
      %600 = vmatmul.mubr.f32.gmra.mxu0 %v476
      %v601 = vpop.f32.mrf.mxu0
      %v602 = vadd.f32 %v472, %v601
      %v603 = vpop.f32.mrf.mxu0
      %604 = vmatprep.mubr.f32.mxu0 0.0
      %605 = vmatmul.mubr.f32.gmra.mxu0 %v479
      %v606 = vpop.f32.mrf.mxu0
      %v607 = vadd.f32 %v472, %v606
      %v608 = vpop.f32.mrf.mxu0
      %609 = vmatprep.mubr.f32.mxu0 0.0
      %610 = vmatmul.mubr.f32.gmra.mxu0 %v482
      %v611 = vpop.f32.mrf.mxu0
      %v612 = vadd.f32 %v472, %v611
      %v613 = vpop.f32.mrf.mxu0
      %614 = vmatprep.mubr.f32.mxu0 0.0
      %615 = vmatmul.mubr.f32.gmra.mxu0 %v485
      %v616 = vpop.f32.mrf.mxu0
      %v617 = vadd.f32 %v472, %v616
      %v618 = vpop.f32.mrf.mxu0
      %619 = vmatprep.mubr.f32.mxu0 0.0
      %620 = vmatmul.mubr.f32.gmra.mxu0 %v488
      %v621 = vpop.f32.mrf.mxu0
      %v622 = vadd.f32 %v472, %v621
      %v623 = vpop.f32.mrf.mxu0
      %624 = vmatprep.mubr.f32.mxu0 0.0
      %625 = vmatmul.mubr.f32.gmra.mxu0 %v491
      %v626 = vpop.f32.mrf.mxu0
      %v627 = vadd.f32 %v472, %v626
      %v628 = vpop.f32.mrf.mxu0
      %629 = vmatprep.mubr.f32.mxu0 0.0
      %630 = vmatmul.mubr.f32.gmra.mxu0 %v494
      %v631 = vpop.f32.mrf.mxu0
      %v632 = vadd.f32 %v472, %v631
      %v633 = vpop.f32.mrf.mxu0
      %634 = vmatprep.mubr.f32.mxu0 0.0
      %635 = vmatmul.mubr.f32.gmra.mxu0 %v497
      %v636 = vpop.f32.mrf.mxu0
      %v637 = vadd.f32 %v472, %v636
      %v638 = vpop.f32.mrf.mxu0
      %639 = vmatprep.mubr.f32.mxu0 0.0
      %640 = vmatmul.mubr.f32.gmra.mxu0 %v500
      %v641 = vpop.f32.mrf.mxu0
      %v642 = vadd.f32 %v472, %v641
      %v643 = vpop.f32.mrf.mxu0
      %644 = vmatprep.mubr.f32.mxu0 0.0
      %645 = vmatmul.mubr.f32.gmra.mxu0 %v503
      %v646 = vpop.f32.mrf.mxu0
      %v647 = vadd.f32 %v472, %v646
      %v648 = vpop.f32.mrf.mxu0
      %649 = vmatprep.mubr.f32.mxu0 0.0
      %650 = vmatmul.mubr.f32.gmra.mxu0 %v506
      %v651 = vpop.f32.mrf.mxu0
      %v652 = vadd.f32 %v472, %v651
      %v653 = vpop.f32.mrf.mxu0
      %654 = vmatprep.mubr.f32.mxu0 0.0
      %655 = vmatmul.mubr.f32.gmra.mxu0 %v509
      %v656 = vpop.f32.mrf.mxu0
      %v657 = vadd.f32 %v472, %v656
      %v658 = vpop.f32.mrf.mxu0
      %659 = vmatprep.mubr.f32.mxu0 0.0
      %660 = vmatmul.mubr.f32.gmra.mxu0 %v512
      %v661 = vpop.f32.mrf.mxu0
      %v662 = vadd.f32 %v472, %v661
      %v663 = vpop.f32.mrf.mxu0
      %664 = vmatprep.mubr.f32.mxu0 0.0
      %665 = vmatmul.mubr.f32.gmra.mxu0 %v515
      %v666 = vpop.f32.mrf.mxu0
      %v667 = vadd.f32 %v472, %v666
      %v668 = vpop.f32.mrf.mxu0
      %669 = vmatprep.mubr.f32.mxu0 0.0
      %670 = vmatmul.mubr.f32.gmra.mxu0 %v518
      %v671 = vpop.f32.mrf.mxu0
      %v672 = vadd.f32 %v472, %v671
      %v673 = vpop.f32.mrf.mxu0
      %674 = vmatprep.mubr.f32.mxu0 0.0
      %675 = vmatmul.mubr.f32.gmra.mxu0 %v521
      %v676 = vpop.f32.mrf.mxu0
      %v677 = vadd.f32 %v472, %v676
      %v678 = vpop.f32.mrf.mxu0
      %679 = vmatprep.mubr.f32.mxu0 0.0
      %680 = vmatmul.mubr.f32.gmra.mxu0 %v524
      %v681 = vpop.f32.mrf.mxu0
      %v682 = vadd.f32 %v472, %v681
      %v683 = vpop.f32.mrf.mxu0
      %684 = vmatprep.mubr.f32.mxu0 0.0
      %685 = vmatmul.mubr.f32.gmra.mxu0 %v527
      %v686 = vpop.f32.mrf.mxu0
      %v687 = vadd.f32 %v472, %v686
      %v688 = vpop.f32.mrf.mxu0
      %689 = vmatprep.mubr.f32.mxu0 0.0
      %690 = vmatmul.mubr.f32.gmra.mxu0 %v530
      %v691 = vpop.f32.mrf.mxu0
      %v692 = vadd.f32 %v472, %v691
      %v693 = vpop.f32.mrf.mxu0
      %694 = vmatprep.mubr.f32.mxu0 0.0
      %695 = vmatmul.mubr.f32.gmra.mxu0 %v533
      %v696 = vpop.f32.mrf.mxu0
      %v697 = vadd.f32 %v472, %v696
      %v698 = vpop.f32.mrf.mxu0
      %699 = vdwg.mxu0
      %vm700 = vcmp.gt.f32.partialorder %v602, 0.0
      %vm701 = vcmp.gt.f32.partialorder %v607, 0.0
      %vm702 = vcmp.gt.f32.partialorder %v612, 0.0
      %vm703 = vcmp.gt.f32.partialorder %v617, 0.0
      %vm704 = vcmp.gt.f32.partialorder %v622, 0.0
      %vm705 = vcmp.gt.f32.partialorder %v627, 0.0
      %vm706 = vcmp.gt.f32.partialorder %v632, 0.0
      %vm707 = vcmp.gt.f32.partialorder %v637, 0.0
      %vm708 = vcmp.gt.f32.partialorder %v642, 0.0
      %vm709 = vcmp.gt.f32.partialorder %v647, 0.0
      %vm710 = vcmp.gt.f32.partialorder %v652, 0.0
      %vm711 = vcmp.gt.f32.partialorder %v657, 0.0
      %vm712 = vcmp.gt.f32.partialorder %v662, 0.0
      %vm713 = vcmp.gt.f32.partialorder %v667, 0.0
      %vm714 = vcmp.gt.f32.partialorder %v672, 0.0
      %vm715 = vcmp.gt.f32.partialorder %v677, 0.0
      %vm716 = vcmp.gt.f32.partialorder %v682, 0.0
      %vm717 = vcmp.gt.f32.partialorder %v687, 0.0
      %vm718 = vcmp.gt.f32.partialorder %v692, 0.0
      %vm719 = vcmp.gt.f32.partialorder %v697, 0.0
      %v720 = vmul.f32 %v602, 0.1
      %v721 = vmul.f32 %v607, 0.1
      %v722 = vmul.f32 %v612, 0.1
      %v723 = vmul.f32 %v617, 0.1
      %v724 = vmul.f32 %v622, 0.1
      %v725 = vmul.f32 %v627, 0.1
      %v726 = vmul.f32 %v632, 0.1
      %v727 = vmul.f32 %v637, 0.1
      %v728 = vmul.f32 %v642, 0.1
      %v729 = vmul.f32 %v647, 0.1
      %v730 = vmul.f32 %v652, 0.1
      %v731 = vmul.f32 %v657, 0.1
      %v732 = vmul.f32 %v662, 0.1
      %v733 = vmul.f32 %v667, 0.1
      %v734 = vmul.f32 %v672, 0.1
      %v735 = vmul.f32 %v677, 0.1
      %v736 = vmul.f32 %v682, 0.1
      %v737 = vmul.f32 %v687, 0.1
      %v738 = vmul.f32 %v692, 0.1
      %v739 = vmul.f32 %v697, 0.1
      %v740 = vsel %vm700, %v602, %v720
      %v741 = vsel %vm701, %v607, %v721
      %v742 = vsel %vm702, %v612, %v722
      %v743 = vsel %vm703, %v617, %v723
      %v744 = vsel %vm704, %v622, %v724
      %v745 = vsel %vm705, %v627, %v725
      %v746 = vsel %vm706, %v632, %v726
      %v747 = vsel %vm707, %v637, %v727
      %v748 = vsel %vm708, %v642, %v728
      %v749 = vsel %vm709, %v647, %v729
      %v750 = vsel %vm710, %v652, %v730
      %v751 = vsel %vm711, %v657, %v731
      %v752 = vsel %vm712, %v662, %v732
      %v753 = vsel %vm713, %v667, %v733
      %v754 = vsel %vm714, %v672, %v734
      %v755 = vsel %vm715, %v677, %v735
      %v756 = vsel %vm716, %v682, %v736
      %v757 = vsel %vm717, %v687, %v737
      %v758 = vsel %vm718, %v692, %v738
      %v759 = vsel %vm719, %v697, %v739
      %v760 = vlaneseq
      %v761 = vshrl.u32 %v760, 7
      %v762 = vadd.s32 %v761, 8
      %v763 = vadd.s32 %v761, 16
      %v764 = vadd.s32 %v761, 24
      %v765 = vadd.s32 %v761, 32
      %v766 = vadd.s32 %v761, 40
      %v767 = vadd.s32 %v761, 48
      %v768 = vadd.s32 %v761, 56
      %v769 = vadd.s32 %v761, 64
      %v770 = vadd.s32 %v761, 72
      %v771 = vadd.s32 %v761, 80
      %v772 = vadd.s32 %v761, 88
      %v773 = vadd.s32 %v761, 96
      %v774 = vadd.s32 %v761, 104
      %v775 = vadd.s32 %v761, 112
      %v776 = vadd.s32 %v761, 120
      %v777 = vadd.s32 %v761, 128
      %v778 = vadd.s32 %v761, 136
      %v779 = vadd.s32 %v761, 144
      %v780 = vadd.s32 %v761, 152
      %vm781 = vcmp.lt.s32.totalorder %v761, 16
      %vm782 = vcmp.lt.s32.totalorder %v762, 16
      %vm783 = vcmp.lt.s32.totalorder %v763, 16
      %vm784 = vcmp.lt.s32.totalorder %v764, 16
      %vm785 = vcmp.lt.s32.totalorder %v765, 16
      %vm786 = vcmp.lt.s32.totalorder %v766, 16
      %vm787 = vcmp.lt.s32.totalorder %v767, 16
      %vm788 = vcmp.lt.s32.totalorder %v768, 16
      %vm789 = vcmp.lt.s32.totalorder %v769, 16
      %vm790 = vcmp.lt.s32.totalorder %v770, 16
      %vm791 = vcmp.lt.s32.totalorder %v771, 16
      %vm792 = vcmp.lt.s32.totalorder %v772, 16
      %vm793 = vcmp.lt.s32.totalorder %v773, 16
      %vm794 = vcmp.lt.s32.totalorder %v774, 16
      %vm795 = vcmp.lt.s32.totalorder %v775, 16
      %vm796 = vcmp.lt.s32.totalorder %v776, 16
      %vm797 = vcmp.lt.s32.totalorder %v777, 16
      %vm798 = vcmp.lt.s32.totalorder %v778, 16
      %vm799 = vcmp.lt.s32.totalorder %v779, 16
      %vm800 = vcmp.lt.s32.totalorder %v780, 16
      %p801 = scmp.eq.s32.totalorder %s23, 0
      %s802 = scalar_select %p801, 1, 0
      %v803 = vstv %s802
      %vm804 = vcmp.eq.s32.totalorder %v803, 1
      %vm805 = vmand %vm781, %vm804
      %vm806 = vmand %vm782, %vm804
      %vm807 = vmand %vm783, %vm804
      %vm808 = vmand %vm784, %vm804
      %vm809 = vmand %vm785, %vm804
      %vm810 = vmand %vm786, %vm804
      %vm811 = vmand %vm787, %vm804
      %vm812 = vmand %vm788, %vm804
      %vm813 = vmand %vm789, %vm804
      %vm814 = vmand %vm790, %vm804
      %vm815 = vmand %vm791, %vm804
      %vm816 = vmand %vm792, %vm804
      %vm817 = vmand %vm793, %vm804
      %vm818 = vmand %vm794, %vm804
      %vm819 = vmand %vm795, %vm804
      %vm820 = vmand %vm796, %vm804
      %vm821 = vmand %vm797, %vm804
      %vm822 = vmand %vm798, %vm804
      %vm823 = vmand %vm799, %vm804
      %vm824 = vmand %vm800, %vm804
      %vm825 = vcmp.ge.s32.totalorder %v761, 144
      %vm826 = vcmp.ge.s32.totalorder %v762, 144
      %vm827 = vcmp.ge.s32.totalorder %v763, 144
      %vm828 = vcmp.ge.s32.totalorder %v764, 144
      %vm829 = vcmp.ge.s32.totalorder %v765, 144
      %vm830 = vcmp.ge.s32.totalorder %v766, 144
      %vm831 = vcmp.ge.s32.totalorder %v767, 144
      %vm832 = vcmp.ge.s32.totalorder %v768, 144
      %vm833 = vcmp.ge.s32.totalorder %v769, 144
      %vm834 = vcmp.ge.s32.totalorder %v770, 144
      %vm835 = vcmp.ge.s32.totalorder %v771, 144
      %vm836 = vcmp.ge.s32.totalorder %v772, 144
      %vm837 = vcmp.ge.s32.totalorder %v773, 144
      %vm838 = vcmp.ge.s32.totalorder %v774, 144
      %vm839 = vcmp.ge.s32.totalorder %v775, 144
      %vm840 = vcmp.ge.s32.totalorder %v776, 144
      %vm841 = vcmp.ge.s32.totalorder %v777, 144
      %vm842 = vcmp.ge.s32.totalorder %v778, 144
      %vm843 = vcmp.ge.s32.totalorder %v779, 144
      %vm844 = vcmp.ge.s32.totalorder %v780, 144
      %p845 = scmp.eq.s32.totalorder %s23, 1
      %s846 = scalar_select %p845, 1, 0
      %v847 = vstv %s846
      %vm848 = vcmp.eq.s32.totalorder %v847, 1
      %vm849 = vmand %vm825, %vm848
      %vm850 = vmand %vm826, %vm848
      %vm851 = vmand %vm827, %vm848
      %vm852 = vmand %vm828, %vm848
      %vm853 = vmand %vm829, %vm848
      %vm854 = vmand %vm830, %vm848
      %vm855 = vmand %vm831, %vm848
      %vm856 = vmand %vm832, %vm848
      %vm857 = vmand %vm833, %vm848
      %vm858 = vmand %vm834, %vm848
      %vm859 = vmand %vm835, %vm848
      %vm860 = vmand %vm836, %vm848
      %vm861 = vmand %vm837, %vm848
      %vm862 = vmand %vm838, %vm848
      %vm863 = vmand %vm839, %vm848
      %vm864 = vmand %vm840, %vm848
      %vm865 = vmand %vm841, %vm848
      %vm866 = vmand %vm842, %vm848
      %vm867 = vmand %vm843, %vm848
      %vm868 = vmand %vm844, %vm848
      %vm869 = vmor %vm805, %vm849
      %vm870 = vmor %vm806, %vm850
      %vm871 = vmor %vm807, %vm851
      %vm872 = vmor %vm808, %vm852
      %vm873 = vmor %vm809, %vm853
      %vm874 = vmor %vm810, %vm854
      %vm875 = vmor %vm811, %vm855
      %vm876 = vmor %vm812, %vm856
      %vm877 = vmor %vm813, %vm857
      %vm878 = vmor %vm814, %vm858
      %vm879 = vmor %vm815, %vm859
      %vm880 = vmor %vm816, %vm860
      %vm881 = vmor %vm817, %vm861
      %vm882 = vmor %vm818, %vm862
      %vm883 = vmor %vm819, %vm863
      %vm884 = vmor %vm820, %vm864
      %vm885 = vmor %vm821, %vm865
      %vm886 = vmor %vm822, %vm866
      %vm887 = vmor %vm823, %vm867
      %vm888 = vmor %vm824, %vm868
      %v889 = vsel %vm869, 1, 0
      %v890 = vsel %vm870, 1, 0
      %v891 = vsel %vm871, 1, 0
      %v892 = vsel %vm872, 1, 0
      %v893 = vsel %vm873, 1, 0
      %v894 = vsel %vm874, 1, 0
      %v895 = vsel %vm875, 1, 0
      %v896 = vsel %vm876, 1, 0
      %v897 = vsel %vm877, 1, 0
      %v898 = vsel %vm878, 1, 0
      %v899 = vsel %vm879, 1, 0
      %v900 = vsel %vm880, 1, 0
      %v901 = vsel %vm881, 1, 0
      %v902 = vsel %vm882, 1, 0
      %v903 = vsel %vm883, 1, 0
      %v904 = vsel %vm884, 1, 0
      %v905 = vsel %vm885, 1, 0
      %v906 = vsel %vm886, 1, 0
      %v907 = vsel %vm887, 1, 0
      %v908 = vsel %vm888, 1, 0
      %vm909 = vcmp.eq.s32.totalorder %v889, 1
      %vm910 = vcmp.eq.s32.totalorder %v890, 1
      %vm911 = vcmp.eq.s32.totalorder %v891, 1
      %vm912 = vcmp.eq.s32.totalorder %v892, 1
      %vm913 = vcmp.eq.s32.totalorder %v893, 1
      %vm914 = vcmp.eq.s32.totalorder %v894, 1
      %vm915 = vcmp.eq.s32.totalorder %v895, 1
      %vm916 = vcmp.eq.s32.totalorder %v896, 1
      %vm917 = vcmp.eq.s32.totalorder %v897, 1
      %vm918 = vcmp.eq.s32.totalorder %v898, 1
      %vm919 = vcmp.eq.s32.totalorder %v899, 1
      %vm920 = vcmp.eq.s32.totalorder %v900, 1
      %vm921 = vcmp.eq.s32.totalorder %v901, 1
      %vm922 = vcmp.eq.s32.totalorder %v902, 1
      %vm923 = vcmp.eq.s32.totalorder %v903, 1
      %vm924 = vcmp.eq.s32.totalorder %v904, 1
      %vm925 = vcmp.eq.s32.totalorder %v905, 1
      %vm926 = vcmp.eq.s32.totalorder %v906, 1
      %vm927 = vcmp.eq.s32.totalorder %v907, 1
      %vm928 = vcmp.eq.s32.totalorder %v908, 1
      %v929 = vsel %vm909, 0.0, %v740
      %v930 = vsel %vm910, 0.0, %v741
      %v931 = vsel %vm911, 0.0, %v742
      %v932 = vsel %vm912, 0.0, %v743
      %v933 = vsel %vm913, 0.0, %v744
      %v934 = vsel %vm914, 0.0, %v745
      %v935 = vsel %vm915, 0.0, %v746
      %v936 = vsel %vm916, 0.0, %v747
      %v937 = vsel %vm917, 0.0, %v748
      %v938 = vsel %vm918, 0.0, %v749
      %v939 = vsel %vm919, 0.0, %v750
      %v940 = vsel %vm920, 0.0, %v751
      %v941 = vsel %vm921, 0.0, %v752
      %v942 = vsel %vm922, 0.0, %v753
      %v943 = vsel %vm923, 0.0, %v754
      %v944 = vsel %vm924, 0.0, %v755
      %v945 = vsel %vm925, 0.0, %v756
      %v946 = vsel %vm926, 0.0, %v757
      %v947 = vsel %vm927, 0.0, %v758
      %v948 = vsel %vm928, 0.0, %v759
      %vm949 = vcmp.lt.s32.totalorder %v761, 0
      %v950 = vsub.s32 0, %v761
      %v951 = vsel %vm949, %v950, %v761
      %v952 = vshrl.u32 %v951, 4
      %v953 = vand.u32 %v951, 15
      %v954 = vsub.s32 0, %v953
      %v955 = vsel %vm949, %v954, %v953
      %vm956 = vcmp.lt.s32.totalorder %v762, 0
      %v957 = vsub.s32 0, %v762
      %v958 = vsel %vm956, %v957, %v762
      %v959 = vshrl.u32 %v958, 4
      %v960 = vand.u32 %v958, 15
      %v961 = vsub.s32 0, %v960
      %v962 = vsel %vm956, %v961, %v960
      %vm963 = vcmp.lt.s32.totalorder %v763, 0
      %v964 = vsub.s32 0, %v763
      %v965 = vsel %vm963, %v964, %v763
      %v966 = vshrl.u32 %v965, 4
      %v967 = vand.u32 %v965, 15
      %v968 = vsub.s32 0, %v967
      %v969 = vsel %vm963, %v968, %v967
      %vm970 = vcmp.lt.s32.totalorder %v764, 0
      %v971 = vsub.s32 0, %v764
      %v972 = vsel %vm970, %v971, %v764
      %v973 = vshrl.u32 %v972, 4
      %v974 = vand.u32 %v972, 15
      %v975 = vsub.s32 0, %v974
      %v976 = vsel %vm970, %v975, %v974
      %vm977 = vcmp.lt.s32.totalorder %v765, 0
      %v978 = vsub.s32 0, %v765
      %v979 = vsel %vm977, %v978, %v765
      %v980 = vshrl.u32 %v979, 4
      %v981 = vand.u32 %v979, 15
      %v982 = vsub.s32 0, %v981
      %v983 = vsel %vm977, %v982, %v981
      %vm984 = vcmp.lt.s32.totalorder %v766, 0
      %v985 = vsub.s32 0, %v766
      %v986 = vsel %vm984, %v985, %v766
      %v987 = vshrl.u32 %v986, 4
      %v988 = vand.u32 %v986, 15
      %v989 = vsub.s32 0, %v988
      %v990 = vsel %vm984, %v989, %v988
      %vm991 = vcmp.lt.s32.totalorder %v767, 0
      %v992 = vsub.s32 0, %v767
      %v993 = vsel %vm991, %v992, %v767
      %v994 = vshrl.u32 %v993, 4
      %v995 = vand.u32 %v993, 15
      %v996 = vsub.s32 0, %v995
      %v997 = vsel %vm991, %v996, %v995
      %vm998 = vcmp.lt.s32.totalorder %v768, 0
      %v999 = vsub.s32 0, %v768
      %v1000 = vsel %vm998, %v999, %v768
      %v1001 = vshrl.u32 %v1000, 4
      %v1002 = vand.u32 %v1000, 15
      %v1003 = vsub.s32 0, %v1002
      %v1004 = vsel %vm998, %v1003, %v1002
      %vm1005 = vcmp.lt.s32.totalorder %v769, 0
      %v1006 = vsub.s32 0, %v769
      %v1007 = vsel %vm1005, %v1006, %v769
      %v1008 = vshrl.u32 %v1007, 4
      %v1009 = vand.u32 %v1007, 15
      %v1010 = vsub.s32 0, %v1009
      %v1011 = vsel %vm1005, %v1010, %v1009
      %vm1012 = vcmp.lt.s32.totalorder %v770, 0
      %v1013 = vsub.s32 0, %v770
      %v1014 = vsel %vm1012, %v1013, %v770
      %v1015 = vshrl.u32 %v1014, 4
      %v1016 = vand.u32 %v1014, 15
      %v1017 = vsub.s32 0, %v1016
      %v1018 = vsel %vm1012, %v1017, %v1016
      %vm1019 = vcmp.lt.s32.totalorder %v771, 0
      %v1020 = vsub.s32 0, %v771
      %v1021 = vsel %vm1019, %v1020, %v771
      %v1022 = vshrl.u32 %v1021, 4
      %v1023 = vand.u32 %v1021, 15
      %v1024 = vsub.s32 0, %v1023
      %v1025 = vsel %vm1019, %v1024, %v1023
      %vm1026 = vcmp.lt.s32.totalorder %v772, 0
      %v1027 = vsub.s32 0, %v772
      %v1028 = vsel %vm1026, %v1027, %v772
      %v1029 = vshrl.u32 %v1028, 4
      %v1030 = vand.u32 %v1028, 15
      %v1031 = vsub.s32 0, %v1030
      %v1032 = vsel %vm1026, %v1031, %v1030
      %vm1033 = vcmp.lt.s32.totalorder %v773, 0
      %v1034 = vsub.s32 0, %v773
      %v1035 = vsel %vm1033, %v1034, %v773
      %v1036 = vshrl.u32 %v1035, 4
      %v1037 = vand.u32 %v1035, 15
      %v1038 = vsub.s32 0, %v1037
      %v1039 = vsel %vm1033, %v1038, %v1037
      %vm1040 = vcmp.lt.s32.totalorder %v774, 0
      %v1041 = vsub.s32 0, %v774
      %v1042 = vsel %vm1040, %v1041, %v774
      %v1043 = vshrl.u32 %v1042, 4
      %v1044 = vand.u32 %v1042, 15
      %v1045 = vsub.s32 0, %v1044
      %v1046 = vsel %vm1040, %v1045, %v1044
      %vm1047 = vcmp.lt.s32.totalorder %v775, 0
      %v1048 = vsub.s32 0, %v775
      %v1049 = vsel %vm1047, %v1048, %v775
      %v1050 = vshrl.u32 %v1049, 4
      %v1051 = vand.u32 %v1049, 15
      %v1052 = vsub.s32 0, %v1051
      %v1053 = vsel %vm1047, %v1052, %v1051
      %vm1054 = vcmp.lt.s32.totalorder %v776, 0
      %v1055 = vsub.s32 0, %v776
      %v1056 = vsel %vm1054, %v1055, %v776
      %v1057 = vshrl.u32 %v1056, 4
      %v1058 = vand.u32 %v1056, 15
      %v1059 = vsub.s32 0, %v1058
      %v1060 = vsel %vm1054, %v1059, %v1058
      %vm1061 = vcmp.lt.s32.totalorder %v777, 0
      %v1062 = vsub.s32 0, %v777
      %v1063 = vsel %vm1061, %v1062, %v777
      %v1064 = vshrl.u32 %v1063, 4
      %v1065 = vand.u32 %v1063, 15
      %v1066 = vsub.s32 0, %v1065
      %v1067 = vsel %vm1061, %v1066, %v1065
      %vm1068 = vcmp.lt.s32.totalorder %v778, 0
      %v1069 = vsub.s32 0, %v778
      %v1070 = vsel %vm1068, %v1069, %v778
      %v1071 = vshrl.u32 %v1070, 4
      %v1072 = vand.u32 %v1070, 15
      %v1073 = vsub.s32 0, %v1072
      %v1074 = vsel %vm1068, %v1073, %v1072
      %vm1075 = vcmp.lt.s32.totalorder %v779, 0
      %v1076 = vsub.s32 0, %v779
      %v1077 = vsel %vm1075, %v1076, %v779
      %v1078 = vshrl.u32 %v1077, 4
      %v1079 = vand.u32 %v1077, 15
      %v1080 = vsub.s32 0, %v1079
      %v1081 = vsel %vm1075, %v1080, %v1079
      %vm1082 = vcmp.lt.s32.totalorder %v780, 0
      %v1083 = vsub.s32 0, %v780
      %v1084 = vsel %vm1082, %v1083, %v780
      %v1085 = vshrl.u32 %v1084, 4
      %v1086 = vand.u32 %v1084, 15
      %v1087 = vsub.s32 0, %v1086
      %v1088 = vsel %vm1082, %v1087, %v1086
      %vm1089 = vcmp.ne.s32.totalorder %v955, 0
      %vm1090 = vcmp.ne.s32.totalorder %v962, 0
      %vm1091 = vcmp.ne.s32.totalorder %v969, 0
      %vm1092 = vcmp.ne.s32.totalorder %v976, 0
      %vm1093 = vcmp.ne.s32.totalorder %v983, 0
      %vm1094 = vcmp.ne.s32.totalorder %v990, 0
      %vm1095 = vcmp.ne.s32.totalorder %v997, 0
      %vm1096 = vcmp.ne.s32.totalorder %v1004, 0
      %vm1097 = vcmp.ne.s32.totalorder %v1011, 0
      %vm1098 = vcmp.ne.s32.totalorder %v1018, 0
      %vm1099 = vcmp.ne.s32.totalorder %v1025, 0
      %vm1100 = vcmp.ne.s32.totalorder %v1032, 0
      %vm1101 = vcmp.ne.s32.totalorder %v1039, 0
      %vm1102 = vcmp.ne.s32.totalorder %v1046, 0
      %vm1103 = vcmp.ne.s32.totalorder %v1053, 0
      %vm1104 = vcmp.ne.s32.totalorder %v1060, 0
      %vm1105 = vcmp.ne.s32.totalorder %v1067, 0
      %vm1106 = vcmp.ne.s32.totalorder %v1074, 0
      %vm1107 = vcmp.ne.s32.totalorder %v1081, 0
      %vm1108 = vcmp.ne.s32.totalorder %v1088, 0
      %vm1109 = vcmp.lt.s32.totalorder %v955, 0
      %vm1110 = vcmp.lt.s32.totalorder %v962, 0
      %vm1111 = vcmp.lt.s32.totalorder %v969, 0
      %vm1112 = vcmp.lt.s32.totalorder %v976, 0
      %vm1113 = vcmp.lt.s32.totalorder %v983, 0
      %vm1114 = vcmp.lt.s32.totalorder %v990, 0
      %vm1115 = vcmp.lt.s32.totalorder %v997, 0
      %vm1116 = vcmp.lt.s32.totalorder %v1004, 0
      %vm1117 = vcmp.lt.s32.totalorder %v1011, 0
      %vm1118 = vcmp.lt.s32.totalorder %v1018, 0
      %vm1119 = vcmp.lt.s32.totalorder %v1025, 0
      %vm1120 = vcmp.lt.s32.totalorder %v1032, 0
      %vm1121 = vcmp.lt.s32.totalorder %v1039, 0
      %vm1122 = vcmp.lt.s32.totalorder %v1046, 0
      %vm1123 = vcmp.lt.s32.totalorder %v1053, 0
      %vm1124 = vcmp.lt.s32.totalorder %v1060, 0
      %vm1125 = vcmp.lt.s32.totalorder %v1067, 0
      %vm1126 = vcmp.lt.s32.totalorder %v1074, 0
      %vm1127 = vcmp.lt.s32.totalorder %v1081, 0
      %vm1128 = vcmp.lt.s32.totalorder %v1088, 0
      %vm1129 = vmand %vm1109, %vm1089
      %vm1130 = vmand %vm1110, %vm1090
      %vm1131 = vmand %vm1111, %vm1091
      %vm1132 = vmand %vm1112, %vm1092
      %vm1133 = vmand %vm1113, %vm1093
      %vm1134 = vmand %vm1114, %vm1094
      %vm1135 = vmand %vm1115, %vm1095
      %vm1136 = vmand %vm1116, %vm1096
      %vm1137 = vmand %vm1117, %vm1097
      %vm1138 = vmand %vm1118, %vm1098
      %vm1139 = vmand %vm1119, %vm1099
      %vm1140 = vmand %vm1120, %vm1100
      %vm1141 = vmand %vm1121, %vm1101
      %vm1142 = vmand %vm1122, %vm1102
      %vm1143 = vmand %vm1123, %vm1103
      %vm1144 = vmand %vm1124, %vm1104
      %vm1145 = vmand %vm1125, %vm1105
      %vm1146 = vmand %vm1126, %vm1106
      %vm1147 = vmand %vm1127, %vm1107
      %vm1148 = vmand %vm1128, %vm1108
      %v1149 = vadd.s32 %v955, 16
      %v1150 = vadd.s32 %v962, 16
      %v1151 = vadd.s32 %v969, 16
      %v1152 = vadd.s32 %v976, 16
      %v1153 = vadd.s32 %v983, 16
      %v1154 = vadd.s32 %v990, 16
      %v1155 = vadd.s32 %v997, 16
      %v1156 = vadd.s32 %v1004, 16
      %v1157 = vadd.s32 %v1011, 16
      %v1158 = vadd.s32 %v1018, 16
      %v1159 = vadd.s32 %v1025, 16
      %v1160 = vadd.s32 %v1032, 16
      %v1161 = vadd.s32 %v1039, 16
      %v1162 = vadd.s32 %v1046, 16
      %v1163 = vadd.s32 %v1053, 16
      %v1164 = vadd.s32 %v1060, 16
      %v1165 = vadd.s32 %v1067, 16
      %v1166 = vadd.s32 %v1074, 16
      %v1167 = vadd.s32 %v1081, 16
      %v1168 = vadd.s32 %v1088, 16
      %v1169 = vsel %vm1129, %v1149, %v955
      %v1170 = vsel %vm1130, %v1150, %v962
      %v1171 = vsel %vm1131, %v1151, %v969
      %v1172 = vsel %vm1132, %v1152, %v976
      %v1173 = vsel %vm1133, %v1153, %v983
      %v1174 = vsel %vm1134, %v1154, %v990
      %v1175 = vsel %vm1135, %v1155, %v997
      %v1176 = vsel %vm1136, %v1156, %v1004
      %v1177 = vsel %vm1137, %v1157, %v1011
      %v1178 = vsel %vm1138, %v1158, %v1018
      %v1179 = vsel %vm1139, %v1159, %v1025
      %v1180 = vsel %vm1140, %v1160, %v1032
      %v1181 = vsel %vm1141, %v1161, %v1039
      %v1182 = vsel %vm1142, %v1162, %v1046
      %v1183 = vsel %vm1143, %v1163, %v1053
      %v1184 = vsel %vm1144, %v1164, %v1060
      %v1185 = vsel %vm1145, %v1165, %v1067
      %v1186 = vsel %vm1146, %v1166, %v1074
      %v1187 = vsel %vm1147, %v1167, %v1081
      %v1188 = vsel %vm1148, %v1168, %v1088
      %vm1209 = vcmask 1040384
      %v1210 = vrot.slane %v929, 7
      %v1211 = vrot.slane %v930, 7
      %v1212 = vsel %vm1209, %v1210, %v1211
      %v1213 = vrot.slane %v931, 7
      %v1214 = vsel %vm1209, %v1211, %v1213
      %v1215 = vrot.slane %v932, 7
      %v1216 = vsel %vm1209, %v1213, %v1215
      %v1217 = vrot.slane %v933, 7
      %v1218 = vsel %vm1209, %v1215, %v1217
      %v1219 = vrot.slane %v934, 7
      %v1220 = vsel %vm1209, %v1217, %v1219
      %v1221 = vrot.slane %v935, 7
      %v1222 = vsel %vm1209, %v1219, %v1221
      %v1223 = vrot.slane %v936, 7
      %v1224 = vsel %vm1209, %v1221, %v1223
      %v1225 = vrot.slane %v937, 7
      %v1226 = vsel %vm1209, %v1223, %v1225
      %v1227 = vrot.slane %v938, 7
      %v1228 = vsel %vm1209, %v1225, %v1227
      %v1229 = vrot.slane %v939, 7
      %v1230 = vsel %vm1209, %v1227, %v1229
      %v1231 = vrot.slane %v940, 7
      %v1232 = vsel %vm1209, %v1229, %v1231
      %v1233 = vrot.slane %v941, 7
      %v1234 = vsel %vm1209, %v1231, %v1233
      %v1235 = vrot.slane %v942, 7
      %v1236 = vsel %vm1209, %v1233, %v1235
      %v1237 = vrot.slane %v943, 7
      %v1238 = vsel %vm1209, %v1235, %v1237
      %v1239 = vrot.slane %v944, 7
      %v1240 = vsel %vm1209, %v1237, %v1239
      %v1241 = vrot.slane %v945, 7
      %v1242 = vsel %vm1209, %v1239, %v1241
      %v1243 = vrot.slane %v946, 7
      %v1244 = vsel %vm1209, %v1241, %v1243
      %v1245 = vrot.slane %v947, 7
      %v1246 = vsel %vm1209, %v1243, %v1245
      %v1247 = vrot.slane %v948, 7
      %v1248 = vsel %vm1209, %v1245, %v1247
      %v1269 = vsel %vm1209, 0.0, %v1210
      %vm1270 = vcmp.eq.s32.totalorder %v1169, 0
      %vm1271 = vcmp.eq.s32.totalorder %v1170, 0
      %vm1272 = vcmp.eq.s32.totalorder %v1171, 0
      %vm1273 = vcmp.eq.s32.totalorder %v1172, 0
      %vm1274 = vcmp.eq.s32.totalorder %v1173, 0
      %vm1275 = vcmp.eq.s32.totalorder %v1174, 0
      %vm1276 = vcmp.eq.s32.totalorder %v1175, 0
      %vm1277 = vcmp.eq.s32.totalorder %v1176, 0
      %vm1278 = vcmp.eq.s32.totalorder %v1177, 0
      %vm1279 = vcmp.eq.s32.totalorder %v1178, 0
      %vm1280 = vcmp.eq.s32.totalorder %v1179, 0
      %vm1281 = vcmp.eq.s32.totalorder %v1180, 0
      %vm1282 = vcmp.eq.s32.totalorder %v1181, 0
      %vm1283 = vcmp.eq.s32.totalorder %v1182, 0
      %vm1284 = vcmp.eq.s32.totalorder %v1183, 0
      %vm1285 = vcmp.eq.s32.totalorder %v1184, 0
      %vm1286 = vcmp.eq.s32.totalorder %v1185, 0
      %vm1287 = vcmp.eq.s32.totalorder %v1186, 0
      %vm1288 = vcmp.eq.s32.totalorder %v1187, 0
      %vm1289 = vcmp.eq.s32.totalorder %v1188, 0
      %v1290 = vsel %vm1270, 1, 0
      %v1291 = vsel %vm1271, 1, 0
      %v1292 = vsel %vm1272, 1, 0
      %v1293 = vsel %vm1273, 1, 0
      %v1294 = vsel %vm1274, 1, 0
      %v1295 = vsel %vm1275, 1, 0
      %v1296 = vsel %vm1276, 1, 0
      %v1297 = vsel %vm1277, 1, 0
      %v1298 = vsel %vm1278, 1, 0
      %v1299 = vsel %vm1279, 1, 0
      %v1300 = vsel %vm1280, 1, 0
      %v1301 = vsel %vm1281, 1, 0
      %v1302 = vsel %vm1282, 1, 0
      %v1303 = vsel %vm1283, 1, 0
      %v1304 = vsel %vm1284, 1, 0
      %v1305 = vsel %vm1285, 1, 0
      %v1306 = vsel %vm1286, 1, 0
      %v1307 = vsel %vm1287, 1, 0
      %v1308 = vsel %vm1288, 1, 0
      %v1309 = vsel %vm1289, 1, 0
      %vm1310 = vcmp.eq.s32.totalorder %v1290, 1
      %vm1311 = vcmp.eq.s32.totalorder %v1291, 1
      %vm1312 = vcmp.eq.s32.totalorder %v1292, 1
      %vm1313 = vcmp.eq.s32.totalorder %v1293, 1
      %vm1314 = vcmp.eq.s32.totalorder %v1294, 1
      %vm1315 = vcmp.eq.s32.totalorder %v1295, 1
      %vm1316 = vcmp.eq.s32.totalorder %v1296, 1
      %vm1317 = vcmp.eq.s32.totalorder %v1297, 1
      %vm1318 = vcmp.eq.s32.totalorder %v1298, 1
      %vm1319 = vcmp.eq.s32.totalorder %v1299, 1
      %vm1320 = vcmp.eq.s32.totalorder %v1300, 1
      %vm1321 = vcmp.eq.s32.totalorder %v1301, 1
      %vm1322 = vcmp.eq.s32.totalorder %v1302, 1
      %vm1323 = vcmp.eq.s32.totalorder %v1303, 1
      %vm1324 = vcmp.eq.s32.totalorder %v1304, 1
      %vm1325 = vcmp.eq.s32.totalorder %v1305, 1
      %vm1326 = vcmp.eq.s32.totalorder %v1306, 1
      %vm1327 = vcmp.eq.s32.totalorder %v1307, 1
      %vm1328 = vcmp.eq.s32.totalorder %v1308, 1
      %vm1329 = vcmp.eq.s32.totalorder %v1309, 1
      %v1330 = vsel %vm1310, 0.0, %v1269
      %v1331 = vsel %vm1311, 0.0, %v1212
      %v1332 = vsel %vm1312, 0.0, %v1214
      %v1333 = vsel %vm1313, 0.0, %v1216
      %v1334 = vsel %vm1314, 0.0, %v1218
      %v1335 = vsel %vm1315, 0.0, %v1220
      %v1336 = vsel %vm1316, 0.0, %v1222
      %v1337 = vsel %vm1317, 0.0, %v1224
      %v1338 = vsel %vm1318, 0.0, %v1226
      %v1339 = vsel %vm1319, 0.0, %v1228
      %v1340 = vsel %vm1320, 0.0, %v1230
      %v1341 = vsel %vm1321, 0.0, %v1232
      %v1342 = vsel %vm1322, 0.0, %v1234
      %v1343 = vsel %vm1323, 0.0, %v1236
      %v1344 = vsel %vm1324, 0.0, %v1238
      %v1345 = vsel %vm1325, 0.0, %v1240
      %v1346 = vsel %vm1326, 0.0, %v1242
      %v1347 = vsel %vm1327, 0.0, %v1244
      %v1348 = vsel %vm1328, 0.0, %v1246
      %v1349 = vsel %vm1329, 0.0, %v1248
      %vm1350 = vcmask 1046528
      %v1351 = vrot.slane %v929, 1
      %v1352 = vrot.slane %v930, 1
      %v1353 = vsel %vm1350, %v1351, %v1352
      %v1354 = vrot.slane %v931, 1
      %v1355 = vsel %vm1350, %v1352, %v1354
      %v1356 = vrot.slane %v932, 1
      %v1357 = vsel %vm1350, %v1354, %v1356
      %v1358 = vrot.slane %v933, 1
      %v1359 = vsel %vm1350, %v1356, %v1358
      %v1360 = vrot.slane %v934, 1
      %v1361 = vsel %vm1350, %v1358, %v1360
      %v1362 = vrot.slane %v935, 1
      %v1363 = vsel %vm1350, %v1360, %v1362
      %v1364 = vrot.slane %v936, 1
      %v1365 = vsel %vm1350, %v1362, %v1364
      %v1366 = vrot.slane %v937, 1
      %v1367 = vsel %vm1350, %v1364, %v1366
      %v1368 = vrot.slane %v938, 1
      %v1369 = vsel %vm1350, %v1366, %v1368
      %v1370 = vrot.slane %v939, 1
      %v1371 = vsel %vm1350, %v1368, %v1370
      %v1372 = vrot.slane %v940, 1
      %v1373 = vsel %vm1350, %v1370, %v1372
      %v1374 = vrot.slane %v941, 1
      %v1375 = vsel %vm1350, %v1372, %v1374
      %v1376 = vrot.slane %v942, 1
      %v1377 = vsel %vm1350, %v1374, %v1376
      %v1378 = vrot.slane %v943, 1
      %v1379 = vsel %vm1350, %v1376, %v1378
      %v1380 = vrot.slane %v944, 1
      %v1381 = vsel %vm1350, %v1378, %v1380
      %v1382 = vrot.slane %v945, 1
      %v1383 = vsel %vm1350, %v1380, %v1382
      %v1384 = vrot.slane %v946, 1
      %v1385 = vsel %vm1350, %v1382, %v1384
      %v1386 = vrot.slane %v947, 1
      %v1387 = vsel %vm1350, %v1384, %v1386
      %v1388 = vrot.slane %v948, 1
      %v1389 = vsel %vm1350, %v1386, %v1388
      %v1410 = vsel %vm1350, %v1388, 0.0
      %vm1411 = vcmp.eq.s32.totalorder %v1169, 15
      %vm1412 = vcmp.eq.s32.totalorder %v1170, 15
      %vm1413 = vcmp.eq.s32.totalorder %v1171, 15
      %vm1414 = vcmp.eq.s32.totalorder %v1172, 15
      %vm1415 = vcmp.eq.s32.totalorder %v1173, 15
      %vm1416 = vcmp.eq.s32.totalorder %v1174, 15
      %vm1417 = vcmp.eq.s32.totalorder %v1175, 15
      %vm1418 = vcmp.eq.s32.totalorder %v1176, 15
      %vm1419 = vcmp.eq.s32.totalorder %v1177, 15
      %vm1420 = vcmp.eq.s32.totalorder %v1178, 15
      %vm1421 = vcmp.eq.s32.totalorder %v1179, 15
      %vm1422 = vcmp.eq.s32.totalorder %v1180, 15
      %vm1423 = vcmp.eq.s32.totalorder %v1181, 15
      %vm1424 = vcmp.eq.s32.totalorder %v1182, 15
      %vm1425 = vcmp.eq.s32.totalorder %v1183, 15
      %vm1426 = vcmp.eq.s32.totalorder %v1184, 15
      %vm1427 = vcmp.eq.s32.totalorder %v1185, 15
      %vm1428 = vcmp.eq.s32.totalorder %v1186, 15
      %vm1429 = vcmp.eq.s32.totalorder %v1187, 15
      %vm1430 = vcmp.eq.s32.totalorder %v1188, 15
      %v1431 = vsel %vm1411, 1, 0
      %v1432 = vsel %vm1412, 1, 0
      %v1433 = vsel %vm1413, 1, 0
      %v1434 = vsel %vm1414, 1, 0
      %v1435 = vsel %vm1415, 1, 0
      %v1436 = vsel %vm1416, 1, 0
      %v1437 = vsel %vm1417, 1, 0
      %v1438 = vsel %vm1418, 1, 0
      %v1439 = vsel %vm1419, 1, 0
      %v1440 = vsel %vm1420, 1, 0
      %v1441 = vsel %vm1421, 1, 0
      %v1442 = vsel %vm1422, 1, 0
      %v1443 = vsel %vm1423, 1, 0
      %v1444 = vsel %vm1424, 1, 0
      %v1445 = vsel %vm1425, 1, 0
      %v1446 = vsel %vm1426, 1, 0
      %v1447 = vsel %vm1427, 1, 0
      %v1448 = vsel %vm1428, 1, 0
      %v1449 = vsel %vm1429, 1, 0
      %v1450 = vsel %vm1430, 1, 0
      %vm1451 = vcmp.eq.s32.totalorder %v1431, 1
      %vm1452 = vcmp.eq.s32.totalorder %v1432, 1
      %vm1453 = vcmp.eq.s32.totalorder %v1433, 1
      %vm1454 = vcmp.eq.s32.totalorder %v1434, 1
      %vm1455 = vcmp.eq.s32.totalorder %v1435, 1
      %vm1456 = vcmp.eq.s32.totalorder %v1436, 1
      %vm1457 = vcmp.eq.s32.totalorder %v1437, 1
      %vm1458 = vcmp.eq.s32.totalorder %v1438, 1
      %vm1459 = vcmp.eq.s32.totalorder %v1439, 1
      %vm1460 = vcmp.eq.s32.totalorder %v1440, 1
      %vm1461 = vcmp.eq.s32.totalorder %v1441, 1
      %vm1462 = vcmp.eq.s32.totalorder %v1442, 1
      %vm1463 = vcmp.eq.s32.totalorder %v1443, 1
      %vm1464 = vcmp.eq.s32.totalorder %v1444, 1
      %vm1465 = vcmp.eq.s32.totalorder %v1445, 1
      %vm1466 = vcmp.eq.s32.totalorder %v1446, 1
      %vm1467 = vcmp.eq.s32.totalorder %v1447, 1
      %vm1468 = vcmp.eq.s32.totalorder %v1448, 1
      %vm1469 = vcmp.eq.s32.totalorder %v1449, 1
      %vm1470 = vcmp.eq.s32.totalorder %v1450, 1
      %v1471 = vsel %vm1451, 0.0, %v1353
      %v1472 = vsel %vm1452, 0.0, %v1355
      %v1473 = vsel %vm1453, 0.0, %v1357
      %v1474 = vsel %vm1454, 0.0, %v1359
      %v1475 = vsel %vm1455, 0.0, %v1361
      %v1476 = vsel %vm1456, 0.0, %v1363
      %v1477 = vsel %vm1457, 0.0, %v1365
      %v1478 = vsel %vm1458, 0.0, %v1367
      %v1479 = vsel %vm1459, 0.0, %v1369
      %v1480 = vsel %vm1460, 0.0, %v1371
      %v1481 = vsel %vm1461, 0.0, %v1373
      %v1482 = vsel %vm1462, 0.0, %v1375
      %v1483 = vsel %vm1463, 0.0, %v1377
      %v1484 = vsel %vm1464, 0.0, %v1379
      %v1485 = vsel %vm1465, 0.0, %v1381
      %v1486 = vsel %vm1466, 0.0, %v1383
      %v1487 = vsel %vm1467, 0.0, %v1385
      %v1488 = vsel %vm1468, 0.0, %v1387
      %v1489 = vsel %vm1469, 0.0, %v1389
      %v1490 = vsel %vm1470, 0.0, %v1410
      %1491 = vrot.lane.b32.xlu0 %v929, 4
      %v1492 = vpop.permute.xlu0 %1491
      %1493 = vrot.lane.b32.xlu0 %v930, 4
      %v1494 = vpop.permute.xlu0 %1493
      %1495 = vrot.lane.b32.xlu0 %v931, 4
      %v1496 = vpop.permute.xlu0 %1495
      %1497 = vrot.lane.b32.xlu0 %v932, 4
      %v1498 = vpop.permute.xlu0 %1497
      %1499 = vrot.lane.b32.xlu0 %v933, 4
      %v1500 = vpop.permute.xlu0 %1499
      %1501 = vrot.lane.b32.xlu0 %v934, 4
      %v1502 = vpop.permute.xlu0 %1501
      %1503 = vrot.lane.b32.xlu0 %v935, 4
      %v1504 = vpop.permute.xlu0 %1503
      %1505 = vrot.lane.b32.xlu0 %v936, 4
      %v1506 = vpop.permute.xlu0 %1505
      %1507 = vrot.lane.b32.xlu0 %v937, 4
      %v1508 = vpop.permute.xlu0 %1507
      %1509 = vrot.lane.b32.xlu0 %v938, 4
      %v1510 = vpop.permute.xlu0 %1509
      %1511 = vrot.lane.b32.xlu0 %v939, 4
      %v1512 = vpop.permute.xlu0 %1511
      %1513 = vrot.lane.b32.xlu0 %v940, 4
      %v1514 = vpop.permute.xlu0 %1513
      %1515 = vrot.lane.b32.xlu0 %v941, 4
      %v1516 = vpop.permute.xlu0 %1515
      %1517 = vrot.lane.b32.xlu0 %v942, 4
      %v1518 = vpop.permute.xlu0 %1517
      %1519 = vrot.lane.b32.xlu0 %v943, 4
      %v1520 = vpop.permute.xlu0 %1519
      %1521 = vrot.lane.b32.xlu0 %v944, 4
      %v1522 = vpop.permute.xlu0 %1521
      %1523 = vrot.lane.b32.xlu0 %v945, 4
      %v1524 = vpop.permute.xlu0 %1523
      %1525 = vrot.lane.b32.xlu0 %v946, 4
      %v1526 = vpop.permute.xlu0 %1525
      %1527 = vrot.lane.b32.xlu0 %v947, 4
      %v1528 = vpop.permute.xlu0 %1527
      %1529 = vrot.lane.b32.xlu0 %v948, 4
      %v1530 = vpop.permute.xlu0 %1529
      %1571 = vrot.lane.b32.xlu0 %v1471, 8
      %v1572 = vpop.permute.xlu0 %1571
      %1573 = vrot.lane.b32.xlu0 %v1472, 8
      %v1574 = vpop.permute.xlu0 %1573
      %1575 = vrot.lane.b32.xlu0 %v1473, 8
      %v1576 = vpop.permute.xlu0 %1575
      %1577 = vrot.lane.b32.xlu0 %v1474, 8
      %v1578 = vpop.permute.xlu0 %1577
      %1579 = vrot.lane.b32.xlu0 %v1475, 8
      %v1580 = vpop.permute.xlu0 %1579
      %1581 = vrot.lane.b32.xlu0 %v1476, 8
      %v1582 = vpop.permute.xlu0 %1581
      %1583 = vrot.lane.b32.xlu0 %v1477, 8
      %v1584 = vpop.permute.xlu0 %1583
      %1585 = vrot.lane.b32.xlu0 %v1478, 8
      %v1586 = vpop.permute.xlu0 %1585
      %1587 = vrot.lane.b32.xlu0 %v1479, 8
      %v1588 = vpop.permute.xlu0 %1587
      %1589 = vrot.lane.b32.xlu0 %v1480, 8
      %v1590 = vpop.permute.xlu0 %1589
      %1591 = vrot.lane.b32.xlu0 %v1481, 8
      %v1592 = vpop.permute.xlu0 %1591
      %1593 = vrot.lane.b32.xlu0 %v1482, 8
      %v1594 = vpop.permute.xlu0 %1593
      %1595 = vrot.lane.b32.xlu0 %v1483, 8
      %v1596 = vpop.permute.xlu0 %1595
      %1597 = vrot.lane.b32.xlu0 %v1484, 8
      %v1598 = vpop.permute.xlu0 %1597
      %1599 = vrot.lane.b32.xlu0 %v1485, 8
      %v1600 = vpop.permute.xlu0 %1599
      %1601 = vrot.lane.b32.xlu0 %v1486, 8
      %v1602 = vpop.permute.xlu0 %1601
      %1603 = vrot.lane.b32.xlu0 %v1487, 8
      %v1604 = vpop.permute.xlu0 %1603
      %1605 = vrot.lane.b32.xlu0 %v1488, 8
      %v1606 = vpop.permute.xlu0 %1605
      %1607 = vrot.lane.b32.xlu0 %v1489, 8
      %v1608 = vpop.permute.xlu0 %1607
      %1609 = vrot.lane.b32.xlu0 %v1490, 8
      %v1610 = vpop.permute.xlu0 %1609
      %vm1631 = vcmask 31744
      %v1632 = vsel %vm1631, %v1330, %v1492
      %v1633 = vsel %vm1631, %v1331, %v1494
      %v1634 = vsel %vm1631, %v1332, %v1496
      %v1635 = vsel %vm1631, %v1333, %v1498
      %v1636 = vsel %vm1631, %v1334, %v1500
      %v1637 = vsel %vm1631, %v1335, %v1502
      %v1638 = vsel %vm1631, %v1336, %v1504
      %v1639 = vsel %vm1631, %v1337, %v1506
      %v1640 = vsel %vm1631, %v1338, %v1508
      %v1641 = vsel %vm1631, %v1339, %v1510
      %v1642 = vsel %vm1631, %v1340, %v1512
      %v1643 = vsel %vm1631, %v1341, %v1514
      %v1644 = vsel %vm1631, %v1342, %v1516
      %v1645 = vsel %vm1631, %v1343, %v1518
      %v1646 = vsel %vm1631, %v1344, %v1520
      %v1647 = vsel %vm1631, %v1345, %v1522
      %v1648 = vsel %vm1631, %v1346, %v1524
      %v1649 = vsel %vm1631, %v1347, %v1526
      %v1650 = vsel %vm1631, %v1348, %v1528
      %v1651 = vsel %vm1631, %v1349, %v1530
      %v1652 = vsel %vm474, %v1632, %v1572
      %v1653 = vsel %vm474, %v1633, %v1574
      %v1654 = vsel %vm474, %v1634, %v1576
      %v1655 = vsel %vm474, %v1635, %v1578
      %v1656 = vsel %vm474, %v1636, %v1580
      %v1657 = vsel %vm474, %v1637, %v1582
      %v1658 = vsel %vm474, %v1638, %v1584
      %v1659 = vsel %vm474, %v1639, %v1586
      %v1660 = vsel %vm474, %v1640, %v1588
      %v1661 = vsel %vm474, %v1641, %v1590
      %v1662 = vsel %vm474, %v1642, %v1592
      %v1663 = vsel %vm474, %v1643, %v1594
      %v1664 = vsel %vm474, %v1644, %v1596
      %v1665 = vsel %vm474, %v1645, %v1598
      %v1666 = vsel %vm474, %v1646, %v1600
      %v1667 = vsel %vm474, %v1647, %v1602
      %v1668 = vsel %vm474, %v1648, %v1604
      %v1669 = vsel %vm474, %v1649, %v1606
      %v1670 = vsel %vm474, %v1650, %v1608
      %v1671 = vsel %vm474, %v1651, %v1610
      %v1672 = vld [vmem:[%s5] sm:$0xff]
      %v1673 = vld [vmem:[%s5 + $0x8] sm:$0xf]
      %s1674 = scalar_lea.vmem %s5, 16
      %v1675 = vld [vmem:[%s1674] sm:$0xff]
      %v1676 = vld [vmem:[%s1674 + $0x8] sm:$0xf]
      %vm1677 = vcmask 97280
      %v1679 = vsel %vm1677, %v1654, 0
      %v1682 = vsel %vm1677, %v1655, 0
      %v1685 = vsel %vm1677, %v1656, 0
      %v1688 = vsel %vm1677, %v1657, 0
      %v1691 = vsel %vm1677, %v1658, 0
      %v1694 = vsel %vm1677, %v1659, 0
      %v1697 = vsel %vm1677, %v1660, 0
      %v1700 = vsel %vm1677, %v1661, 0
      %v1703 = vsel %vm1677, %v1662, 0
      %v1706 = vsel %vm1677, %v1663, 0
      %v1709 = vsel %vm1677, %v1664, 0
      %v1712 = vsel %vm1677, %v1665, 0
      %v1715 = vsel %vm1677, %v1666, 0
      %v1718 = vsel %vm1677, %v1667, 0
      %v1721 = vsel %vm1677, %v1668, 0
      %v1724 = vsel %vm1677, %v1669, 0
      %vm1726 = vcmask 1043456
      %v1728 = vsel %vm1726, %v1676, 0
      %1730 = vmatprep.subr.mxu0 0.0
      %1731 = vmatpush1.msra.mxu0 0.0
      %1732 = vmatprep.subr.mxu0 0.0
      %1733 = vmatpush1.msra.mxu0 0.0
      %1734 = vmatprep.subr.mxu0 0.0
      %1735 = vmatpush1.msra.mxu0 0.0
      %1736 = vmatprep.subr.mxu0 0.0
      %1737 = vmatpush1.msra.mxu0 0.0
      %1738 = vmatprep.subr.mxu0 0.0
      %1739 = vmatpush1.msra.mxu0 0.0
      %1740 = vmatprep.subr.mxu0 0.0
      %1741 = vmatpush1.msra.mxu0 0.0
      %1742 = vmatprep.subr.mxu0 0.0
      %1743 = vmatpush1.msra.mxu0 0.0
      %1744 = vmatprep.subr.mxu0 0.0
      %1745 = vmatpush1.msra.mxu0 0.0
      %1746 = vmatprep.subr.mxu0 0.0
      %1747 = vmatpush1.msra.mxu0 0.0
      %1748 = vmatprep.subr.mxu0 0.0
      %1749 = vmatpush1.msra.mxu0 0.0
      %1750 = vmatprep.subr.mxu0 0.0
      %1751 = vmatpush1.msra.mxu0 0.0
      %1752 = vmatprep.subr.mxu0 0.0
      %1753 = vmatpush1.msra.mxu0 0.0
      %1754 = vmatprep.subr.mxu0 0.0
      %1755 = vmatpush1.msra.mxu0 0.0
      %1756 = vmatprep.subr.mxu0 0.0
      %1757 = vmatpush1.msra.mxu0 0.0
      %1758 = vmatprep.subr.mxu0 0.0
      %1759 = vmatpush1.msra.mxu0 %v1728
      %1760 = vmatprep.subr.mxu0 0.0
      %1761 = vmatpush1.msra.mxu0 %v1675
      %1762 = vmatprep.subr.mxu0 0.0
      %1763 = vmatpush2.msra.mxu0 0.0
      %1764 = vmatprep.subr.mxu0 0.0
      %1765 = vmatpush2.msra.mxu0 0.0
      %1766 = vmatprep.subr.mxu0 0.0
      %1767 = vmatpush2.msra.mxu0 0.0
      %1768 = vmatprep.subr.mxu0 0.0
      %1769 = vmatpush2.msra.mxu0 0.0
      %1770 = vmatprep.subr.mxu0 0.0
      %1771 = vmatpush2.msra.mxu0 0.0
      %1772 = vmatprep.subr.mxu0 0.0
      %1773 = vmatpush2.msra.mxu0 0.0
      %1774 = vmatprep.subr.mxu0 0.0
      %1775 = vmatpush2.msra.mxu0 0.0
      %1776 = vmatprep.subr.mxu0 0.0
      %1777 = vmatpush2.msra.mxu0 0.0
      %1778 = vmatprep.subr.mxu0 0.0
      %1779 = vmatpush2.msra.mxu0 0.0
      %1780 = vmatprep.subr.mxu0 0.0
      %1781 = vmatpush2.msra.mxu0 0.0
      %1782 = vmatprep.subr.mxu0 0.0
      %1783 = vmatpush2.msra.mxu0 0.0
      %1784 = vmatprep.subr.mxu0 0.0
      %1785 = vmatpush2.msra.mxu0 0.0
      %1786 = vmatprep.subr.mxu0 0.0
      %1787 = vmatpush2.msra.mxu0 0.0
      %1788 = vmatprep.subr.mxu0 0.0
      %1789 = vmatpush2.msra.mxu0 0.0
      %1790 = vmatprep.subr.mxu0 0.0
      %1791 = vmatpush2.msra.mxu0 0.0
      %1792 = vmatprep.subr.mxu0 0.0
      %1793 = vmatpush2.msra.mxu0 0.0
      %1794 = vmatprep.mubr.f32.mxu0 0.0
      %1795 = vmatmul.mubr.f32.gmra.mxu0 %v1679
      %v1796 = vpop.f32.mrf.mxu0
      %v1797 = vadd.f32 0.0, %v1796
      %v1798 = vpop.f32.mrf.mxu0
      %1799 = vmatprep.mubr.f32.mxu0 0.0
      %1800 = vmatmul.mubr.f32.gmra.mxu0 %v1682
      %v1801 = vpop.f32.mrf.mxu0
      %v1802 = vadd.f32 0.0, %v1801
      %v1803 = vpop.f32.mrf.mxu0
      %1804 = vmatprep.mubr.f32.mxu0 0.0
      %1805 = vmatmul.mubr.f32.gmra.mxu0 %v1685
      %v1806 = vpop.f32.mrf.mxu0
      %v1807 = vadd.f32 0.0, %v1806
      %v1808 = vpop.f32.mrf.mxu0
      %1809 = vmatprep.mubr.f32.mxu0 0.0
      %1810 = vmatmul.mubr.f32.gmra.mxu0 %v1688
      %v1811 = vpop.f32.mrf.mxu0
      %v1812 = vadd.f32 0.0, %v1811
      %v1813 = vpop.f32.mrf.mxu0
      %1814 = vmatprep.mubr.f32.mxu0 0.0
      %1815 = vmatmul.mubr.f32.gmra.mxu0 %v1691
      %v1816 = vpop.f32.mrf.mxu0
      %v1817 = vadd.f32 0.0, %v1816
      %v1818 = vpop.f32.mrf.mxu0
      %1819 = vmatprep.mubr.f32.mxu0 0.0
      %1820 = vmatmul.mubr.f32.gmra.mxu0 %v1694
      %v1821 = vpop.f32.mrf.mxu0
      %v1822 = vadd.f32 0.0, %v1821
      %v1823 = vpop.f32.mrf.mxu0
      %1824 = vmatprep.mubr.f32.mxu0 0.0
      %1825 = vmatmul.mubr.f32.gmra.mxu0 %v1697
      %v1826 = vpop.f32.mrf.mxu0
      %v1827 = vadd.f32 0.0, %v1826
      %v1828 = vpop.f32.mrf.mxu0
      %1829 = vmatprep.mubr.f32.mxu0 0.0
      %1830 = vmatmul.mubr.f32.gmra.mxu0 %v1700
      %v1831 = vpop.f32.mrf.mxu0
      %v1832 = vadd.f32 0.0, %v1831
      %v1833 = vpop.f32.mrf.mxu0
      %1834 = vmatprep.mubr.f32.mxu0 0.0
      %1835 = vmatmul.mubr.f32.gmra.mxu0 %v1703
      %v1836 = vpop.f32.mrf.mxu0
      %v1837 = vadd.f32 0.0, %v1836
      %v1838 = vpop.f32.mrf.mxu0
      %1839 = vmatprep.mubr.f32.mxu0 0.0
      %1840 = vmatmul.mubr.f32.gmra.mxu0 %v1706
      %v1841 = vpop.f32.mrf.mxu0
      %v1842 = vadd.f32 0.0, %v1841
      %v1843 = vpop.f32.mrf.mxu0
      %1844 = vmatprep.mubr.f32.mxu0 0.0
      %1845 = vmatmul.mubr.f32.gmra.mxu0 %v1709
      %v1846 = vpop.f32.mrf.mxu0
      %v1847 = vadd.f32 0.0, %v1846
      %v1848 = vpop.f32.mrf.mxu0
      %1849 = vmatprep.mubr.f32.mxu0 0.0
      %1850 = vmatmul.mubr.f32.gmra.mxu0 %v1712
      %v1851 = vpop.f32.mrf.mxu0
      %v1852 = vadd.f32 0.0, %v1851
      %v1853 = vpop.f32.mrf.mxu0
      %1854 = vmatprep.mubr.f32.mxu0 0.0
      %1855 = vmatmul.mubr.f32.gmra.mxu0 %v1715
      %v1856 = vpop.f32.mrf.mxu0
      %v1857 = vadd.f32 0.0, %v1856
      %v1858 = vpop.f32.mrf.mxu0
      %1859 = vmatprep.mubr.f32.mxu0 0.0
      %1860 = vmatmul.mubr.f32.gmra.mxu0 %v1718
      %v1861 = vpop.f32.mrf.mxu0
      %v1862 = vadd.f32 0.0, %v1861
      %v1863 = vpop.f32.mrf.mxu0
      %1864 = vmatprep.mubr.f32.mxu0 0.0
      %1865 = vmatmul.mubr.f32.gmra.mxu0 %v1721
      %v1866 = vpop.f32.mrf.mxu0
      %v1867 = vadd.f32 0.0, %v1866
      %v1868 = vpop.f32.mrf.mxu0
      %1869 = vmatprep.mubr.f32.mxu0 0.0
      %1870 = vmatmul.mubr.f32.gmra.mxu0 %v1724
      %v1871 = vpop.f32.mrf.mxu0
      %v1872 = vadd.f32 0.0, %v1871
      %v1873 = vpop.f32.mrf.mxu0
      %1874 = vdwg.mxu0
      %v1876 = vsel %vm1677, %v1652, 0
      %v1879 = vsel %vm1677, %v1653, 0
      %v1882 = vsel %vm1726, %v1673, 0
      %1884 = vmatprep.subr.mxu0 0.0
      %1885 = vmatpush1.msra.mxu0 0.0
      %1886 = vmatprep.subr.mxu0 0.0
      %1887 = vmatpush1.msra.mxu0 0.0
      %1888 = vmatprep.subr.mxu0 0.0
      %1889 = vmatpush1.msra.mxu0 0.0
      %1890 = vmatprep.subr.mxu0 0.0
      %1891 = vmatpush1.msra.mxu0 0.0
      %1892 = vmatprep.subr.mxu0 0.0
      %1893 = vmatpush1.msra.mxu0 0.0
      %1894 = vmatprep.subr.mxu0 0.0
      %1895 = vmatpush1.msra.mxu0 0.0
      %1896 = vmatprep.subr.mxu0 0.0
      %1897 = vmatpush1.msra.mxu0 0.0
      %1898 = vmatprep.subr.mxu0 0.0
      %1899 = vmatpush1.msra.mxu0 0.0
      %1900 = vmatprep.subr.mxu0 0.0
      %1901 = vmatpush1.msra.mxu0 0.0
      %1902 = vmatprep.subr.mxu0 0.0
      %1903 = vmatpush1.msra.mxu0 0.0
      %1904 = vmatprep.subr.mxu0 0.0
      %1905 = vmatpush1.msra.mxu0 0.0
      %1906 = vmatprep.subr.mxu0 0.0
      %1907 = vmatpush1.msra.mxu0 0.0
      %1908 = vmatprep.subr.mxu0 0.0
      %1909 = vmatpush1.msra.mxu0 0.0
      %1910 = vmatprep.subr.mxu0 0.0
      %1911 = vmatpush1.msra.mxu0 0.0
      %1912 = vmatprep.subr.mxu0 0.0
      %1913 = vmatpush1.msra.mxu0 %v1882
      %1914 = vmatprep.subr.mxu0 0.0
      %1915 = vmatpush1.msra.mxu0 %v1672
      %1916 = vmatprep.subr.mxu0 0.0
      %1917 = vmatpush2.msra.mxu0 0.0
      %1918 = vmatprep.subr.mxu0 0.0
      %1919 = vmatpush2.msra.mxu0 0.0
      %1920 = vmatprep.subr.mxu0 0.0
      %1921 = vmatpush2.msra.mxu0 0.0
      %1922 = vmatprep.subr.mxu0 0.0
      %1923 = vmatpush2.msra.mxu0 0.0
      %1924 = vmatprep.subr.mxu0 0.0
      %1925 = vmatpush2.msra.mxu0 0.0
      %1926 = vmatprep.subr.mxu0 0.0
      %1927 = vmatpush2.msra.mxu0 0.0
      %1928 = vmatprep.subr.mxu0 0.0
      %1929 = vmatpush2.msra.mxu0 0.0
      %1930 = vmatprep.subr.mxu0 0.0
      %1931 = vmatpush2.msra.mxu0 0.0
      %1932 = vmatprep.subr.mxu0 0.0
      %1933 = vmatpush2.msra.mxu0 0.0
      %1934 = vmatprep.subr.mxu0 0.0
      %1935 = vmatpush2.msra.mxu0 0.0
      %1936 = vmatprep.subr.mxu0 0.0
      %1937 = vmatpush2.msra.mxu0 0.0
      %1938 = vmatprep.subr.mxu0 0.0
      %1939 = vmatpush2.msra.mxu0 0.0
      %1940 = vmatprep.subr.mxu0 0.0
      %1941 = vmatpush2.msra.mxu0 0.0
      %1942 = vmatprep.subr.mxu0 0.0
      %1943 = vmatpush2.msra.mxu0 0.0
      %1944 = vmatprep.subr.mxu0 0.0
      %1945 = vmatpush2.msra.mxu0 0.0
      %1946 = vmatprep.subr.mxu0 0.0
      %1947 = vmatpush2.msra.mxu0 0.0
      %1948 = vmatprep.mubr.f32.mxu0 0.0
      %1949 = vmatmul.mubr.f32.gmra.mxu0 %v1876
      %v1950 = vpop.f32.mrf.mxu0
      %v1951 = vadd.f32 %v1797, %v1950
      %v1952 = vpop.f32.mrf.mxu0
      %1953 = vmatprep.mubr.f32.mxu0 0.0
      %1954 = vmatmul.mubr.f32.gmra.mxu0 %v1879
      %v1955 = vpop.f32.mrf.mxu0
      %v1956 = vadd.f32 %v1802, %v1955
      %v1957 = vpop.f32.mrf.mxu0
      %1958 = vmatprep.mubr.f32.mxu0 0.0
      %1959 = vmatmul.mubr.f32.gmra.mxu0 %v1679
      %v1960 = vpop.f32.mrf.mxu0
      %v1961 = vadd.f32 %v1807, %v1960
      %v1962 = vpop.f32.mrf.mxu0
      %1963 = vmatprep.mubr.f32.mxu0 0.0
      %1964 = vmatmul.mubr.f32.gmra.mxu0 %v1682
      %v1965 = vpop.f32.mrf.mxu0
      %v1966 = vadd.f32 %v1812, %v1965
      %v1967 = vpop.f32.mrf.mxu0
      %1968 = vmatprep.mubr.f32.mxu0 0.0
      %1969 = vmatmul.mubr.f32.gmra.mxu0 %v1685
      %v1970 = vpop.f32.mrf.mxu0
      %v1971 = vadd.f32 %v1817, %v1970
      %v1972 = vpop.f32.mrf.mxu0
      %1973 = vmatprep.mubr.f32.mxu0 0.0
      %1974 = vmatmul.mubr.f32.gmra.mxu0 %v1688
      %v1975 = vpop.f32.mrf.mxu0
      %v1976 = vadd.f32 %v1822, %v1975
      %v1977 = vpop.f32.mrf.mxu0
      %1978 = vmatprep.mubr.f32.mxu0 0.0
      %1979 = vmatmul.mubr.f32.gmra.mxu0 %v1691
      %v1980 = vpop.f32.mrf.mxu0
      %v1981 = vadd.f32 %v1827, %v1980
      %v1982 = vpop.f32.mrf.mxu0
      %1983 = vmatprep.mubr.f32.mxu0 0.0
      %1984 = vmatmul.mubr.f32.gmra.mxu0 %v1694
      %v1985 = vpop.f32.mrf.mxu0
      %v1986 = vadd.f32 %v1832, %v1985
      %v1987 = vpop.f32.mrf.mxu0
      %1988 = vmatprep.mubr.f32.mxu0 0.0
      %1989 = vmatmul.mubr.f32.gmra.mxu0 %v1697
      %v1990 = vpop.f32.mrf.mxu0
      %v1991 = vadd.f32 %v1837, %v1990
      %v1992 = vpop.f32.mrf.mxu0
      %1993 = vmatprep.mubr.f32.mxu0 0.0
      %1994 = vmatmul.mubr.f32.gmra.mxu0 %v1700
      %v1995 = vpop.f32.mrf.mxu0
      %v1996 = vadd.f32 %v1842, %v1995
      %v1997 = vpop.f32.mrf.mxu0
      %1998 = vmatprep.mubr.f32.mxu0 0.0
      %1999 = vmatmul.mubr.f32.gmra.mxu0 %v1703
      %v2000 = vpop.f32.mrf.mxu0
      %v2001 = vadd.f32 %v1847, %v2000
      %v2002 = vpop.f32.mrf.mxu0
      %2003 = vmatprep.mubr.f32.mxu0 0.0
      %2004 = vmatmul.mubr.f32.gmra.mxu0 %v1706
      %v2005 = vpop.f32.mrf.mxu0
      %v2006 = vadd.f32 %v1852, %v2005
      %v2007 = vpop.f32.mrf.mxu0
      %2008 = vmatprep.mubr.f32.mxu0 0.0
      %2009 = vmatmul.mubr.f32.gmra.mxu0 %v1709
      %v2010 = vpop.f32.mrf.mxu0
      %v2011 = vadd.f32 %v1857, %v2010
      %v2012 = vpop.f32.mrf.mxu0
      %2013 = vmatprep.mubr.f32.mxu0 0.0
      %2014 = vmatmul.mubr.f32.gmra.mxu0 %v1712
      %v2015 = vpop.f32.mrf.mxu0
      %v2016 = vadd.f32 %v1862, %v2015
      %v2017 = vpop.f32.mrf.mxu0
      %2018 = vmatprep.mubr.f32.mxu0 0.0
      %2019 = vmatmul.mubr.f32.gmra.mxu0 %v1715
      %v2020 = vpop.f32.mrf.mxu0
      %v2021 = vadd.f32 %v1867, %v2020
      %v2022 = vpop.f32.mrf.mxu0
      %2023 = vmatprep.mubr.f32.mxu0 0.0
      %2024 = vmatmul.mubr.f32.gmra.mxu0 %v1718
      %v2025 = vpop.f32.mrf.mxu0
      %v2026 = vadd.f32 %v1872, %v2025
      %v2027 = vpop.f32.mrf.mxu0
      %2028 = vdwg.mxu0
      %s2029 = scalar_lea.vmem %s5, 32
      %v2030 = vld [vmem:[%s2029] sm:$0xff]
      %v2031 = vld [vmem:[%s2029 + $0x8] sm:$0xf]
      %v2033 = vsel %vm1677, %v1670, 0
      %v2036 = vsel %vm1677, %v1671, 0
      %v2039 = vsel %vm1726, %v2031, 0
      %2041 = vmatprep.subr.mxu0 0.0
      %2042 = vmatpush1.msra.mxu0 0.0
      %2043 = vmatprep.subr.mxu0 0.0
      %2044 = vmatpush1.msra.mxu0 0.0
      %2045 = vmatprep.subr.mxu0 0.0
      %2046 = vmatpush1.msra.mxu0 0.0
      %2047 = vmatprep.subr.mxu0 0.0
      %2048 = vmatpush1.msra.mxu0 0.0
      %2049 = vmatprep.subr.mxu0 0.0
      %2050 = vmatpush1.msra.mxu0 0.0
      %2051 = vmatprep.subr.mxu0 0.0
      %2052 = vmatpush1.msra.mxu0 0.0
      %2053 = vmatprep.subr.mxu0 0.0
      %2054 = vmatpush1.msra.mxu0 0.0
      %2055 = vmatprep.subr.mxu0 0.0
      %2056 = vmatpush1.msra.mxu0 0.0
      %2057 = vmatprep.subr.mxu0 0.0
      %2058 = vmatpush1.msra.mxu0 0.0
      %2059 = vmatprep.subr.mxu0 0.0
      %2060 = vmatpush1.msra.mxu0 0.0
      %2061 = vmatprep.subr.mxu0 0.0
      %2062 = vmatpush1.msra.mxu0 0.0
      %2063 = vmatprep.subr.mxu0 0.0
      %2064 = vmatpush1.msra.mxu0 0.0
      %2065 = vmatprep.subr.mxu0 0.0
      %2066 = vmatpush1.msra.mxu0 0.0
      %2067 = vmatprep.subr.mxu0 0.0
      %2068 = vmatpush1.msra.mxu0 0.0
      %2069 = vmatprep.subr.mxu0 0.0
      %2070 = vmatpush1.msra.mxu0 %v2039
      %2071 = vmatprep.subr.mxu0 0.0
      %2072 = vmatpush1.msra.mxu0 %v2030
      %2073 = vmatprep.subr.mxu0 0.0
      %2074 = vmatpush2.msra.mxu0 0.0
      %2075 = vmatprep.subr.mxu0 0.0
      %2076 = vmatpush2.msra.mxu0 0.0
      %2077 = vmatprep.subr.mxu0 0.0
      %2078 = vmatpush2.msra.mxu0 0.0
      %2079 = vmatprep.subr.mxu0 0.0
      %2080 = vmatpush2.msra.mxu0 0.0
      %2081 = vmatprep.subr.mxu0 0.0
      %2082 = vmatpush2.msra.mxu0 0.0
      %2083 = vmatprep.subr.mxu0 0.0
      %2084 = vmatpush2.msra.mxu0 0.0
      %2085 = vmatprep.subr.mxu0 0.0
      %2086 = vmatpush2.msra.mxu0 0.0
      %2087 = vmatprep.subr.mxu0 0.0
      %2088 = vmatpush2.msra.mxu0 0.0
      %2089 = vmatprep.subr.mxu0 0.0
      %2090 = vmatpush2.msra.mxu0 0.0
      %2091 = vmatprep.subr.mxu0 0.0
      %2092 = vmatpush2.msra.mxu0 0.0
      %2093 = vmatprep.subr.mxu0 0.0
      %2094 = vmatpush2.msra.mxu0 0.0
      %2095 = vmatprep.subr.mxu0 0.0
      %2096 = vmatpush2.msra.mxu0 0.0
      %2097 = vmatprep.subr.mxu0 0.0
      %2098 = vmatpush2.msra.mxu0 0.0
      %2099 = vmatprep.subr.mxu0 0.0
      %2100 = vmatpush2.msra.mxu0 0.0
      %2101 = vmatprep.subr.mxu0 0.0
      %2102 = vmatpush2.msra.mxu0 0.0
      %2103 = vmatprep.subr.mxu0 0.0
      %2104 = vmatpush2.msra.mxu0 0.0
      %2105 = vmatprep.mubr.f32.mxu0 0.0
      %2106 = vmatmul.mubr.f32.gmra.mxu0 %v1685
      %v2107 = vpop.f32.mrf.mxu0
      %v2108 = vadd.f32 0.0, %v2107
      %v2109 = vpop.f32.mrf.mxu0
      %2110 = vmatprep.mubr.f32.mxu0 0.0
      %2111 = vmatmul.mubr.f32.gmra.mxu0 %v1688
      %v2112 = vpop.f32.mrf.mxu0
      %v2113 = vadd.f32 0.0, %v2112
      %v2114 = vpop.f32.mrf.mxu0
      %2115 = vmatprep.mubr.f32.mxu0 0.0
      %2116 = vmatmul.mubr.f32.gmra.mxu0 %v1691
      %v2117 = vpop.f32.mrf.mxu0
      %v2118 = vadd.f32 0.0, %v2117
      %v2119 = vpop.f32.mrf.mxu0
      %2120 = vmatprep.mubr.f32.mxu0 0.0
      %2121 = vmatmul.mubr.f32.gmra.mxu0 %v1694
      %v2122 = vpop.f32.mrf.mxu0
      %v2123 = vadd.f32 0.0, %v2122
      %v2124 = vpop.f32.mrf.mxu0
      %2125 = vmatprep.mubr.f32.mxu0 0.0
      %2126 = vmatmul.mubr.f32.gmra.mxu0 %v1697
      %v2127 = vpop.f32.mrf.mxu0
      %v2128 = vadd.f32 0.0, %v2127
      %v2129 = vpop.f32.mrf.mxu0
      %2130 = vmatprep.mubr.f32.mxu0 0.0
      %2131 = vmatmul.mubr.f32.gmra.mxu0 %v1700
      %v2132 = vpop.f32.mrf.mxu0
      %v2133 = vadd.f32 0.0, %v2132
      %v2134 = vpop.f32.mrf.mxu0
      %2135 = vmatprep.mubr.f32.mxu0 0.0
      %2136 = vmatmul.mubr.f32.gmra.mxu0 %v1703
      %v2137 = vpop.f32.mrf.mxu0
      %v2138 = vadd.f32 0.0, %v2137
      %v2139 = vpop.f32.mrf.mxu0
      %2140 = vmatprep.mubr.f32.mxu0 0.0
      %2141 = vmatmul.mubr.f32.gmra.mxu0 %v1706
      %v2142 = vpop.f32.mrf.mxu0
      %v2143 = vadd.f32 0.0, %v2142
      %v2144 = vpop.f32.mrf.mxu0
      %2145 = vmatprep.mubr.f32.mxu0 0.0
      %2146 = vmatmul.mubr.f32.gmra.mxu0 %v1709
      %v2147 = vpop.f32.mrf.mxu0
      %v2148 = vadd.f32 0.0, %v2147
      %v2149 = vpop.f32.mrf.mxu0
      %2150 = vmatprep.mubr.f32.mxu0 0.0
      %2151 = vmatmul.mubr.f32.gmra.mxu0 %v1712
      %v2152 = vpop.f32.mrf.mxu0
      %v2153 = vadd.f32 0.0, %v2152
      %v2154 = vpop.f32.mrf.mxu0
      %2155 = vmatprep.mubr.f32.mxu0 0.0
      %2156 = vmatmul.mubr.f32.gmra.mxu0 %v1715
      %v2157 = vpop.f32.mrf.mxu0
      %v2158 = vadd.f32 0.0, %v2157
      %v2159 = vpop.f32.mrf.mxu0
      %2160 = vmatprep.mubr.f32.mxu0 0.0
      %2161 = vmatmul.mubr.f32.gmra.mxu0 %v1718
      %v2162 = vpop.f32.mrf.mxu0
      %v2163 = vadd.f32 0.0, %v2162
      %v2164 = vpop.f32.mrf.mxu0
      %2165 = vmatprep.mubr.f32.mxu0 0.0
      %2166 = vmatmul.mubr.f32.gmra.mxu0 %v1721
      %v2167 = vpop.f32.mrf.mxu0
      %v2168 = vadd.f32 0.0, %v2167
      %v2169 = vpop.f32.mrf.mxu0
      %2170 = vmatprep.mubr.f32.mxu0 0.0
      %2171 = vmatmul.mubr.f32.gmra.mxu0 %v1724
      %v2172 = vpop.f32.mrf.mxu0
      %v2173 = vadd.f32 0.0, %v2172
      %v2174 = vpop.f32.mrf.mxu0
      %2175 = vmatprep.mubr.f32.mxu0 0.0
      %2176 = vmatmul.mubr.f32.gmra.mxu0 %v2033
      %v2177 = vpop.f32.mrf.mxu0
      %v2178 = vadd.f32 0.0, %v2177
      %v2179 = vpop.f32.mrf.mxu0
      %2180 = vmatprep.mubr.f32.mxu0 0.0
      %2181 = vmatmul.mubr.f32.gmra.mxu0 %v2036
      %v2182 = vpop.f32.mrf.mxu0
      %v2183 = vadd.f32 0.0, %v2182
      %v2184 = vpop.f32.mrf.mxu0
      %2185 = vdwg.mxu0
      %v2186 = vadd.f32 %v1951, %v2108
      %v2187 = vadd.f32 %v1956, %v2113
      %v2188 = vadd.f32 %v1961, %v2118
      %v2189 = vadd.f32 %v1966, %v2123
      %v2190 = vadd.f32 %v1971, %v2128
      %v2191 = vadd.f32 %v1976, %v2133
      %v2192 = vadd.f32 %v1981, %v2138
      %v2193 = vadd.f32 %v1986, %v2143
      %v2194 = vadd.f32 %v1991, %v2148
      %v2195 = vadd.f32 %v1996, %v2153
      %v2196 = vadd.f32 %v2001, %v2158
      %v2197 = vadd.f32 %v2006, %v2163
      %v2198 = vadd.f32 %v2011, %v2168
      %v2199 = vadd.f32 %v2016, %v2173
      %v2200 = vadd.f32 %v2021, %v2178
      %v2201 = vadd.f32 %v2026, %v2183
      %v2202 = vld [vmem:[%s6] sm:$0x1]
      %v2204 = vlaneseq
      %v2205 = vshrl.u32 %v2204, 7
      %v2206 = vsub.s32 0, %v2205
      %v2207 = vrot.slane %v2202, %v2206
      %v2209 = vadd.f32 %v2186, %v2207
      %v2210 = vadd.f32 %v2187, %v2207
      %v2211 = vadd.f32 %v2188, %v2207
      %v2212 = vadd.f32 %v2189, %v2207
      %v2213 = vadd.f32 %v2190, %v2207
      %v2214 = vadd.f32 %v2191, %v2207
      %v2215 = vadd.f32 %v2192, %v2207
      %v2216 = vadd.f32 %v2193, %v2207
      %v2217 = vadd.f32 %v2194, %v2207
      %v2218 = vadd.f32 %v2195, %v2207
      %v2219 = vadd.f32 %v2196, %v2207
      %v2220 = vadd.f32 %v2197, %v2207
      %v2221 = vadd.f32 %v2198, %v2207
      %v2222 = vadd.f32 %v2199, %v2207
      %v2223 = vadd.f32 %v2200, %v2207
      %v2224 = vadd.f32 %v2201, %v2207
      %vm2225 = vcmp.gt.f32.partialorder %v2209, 0.0
      %vm2226 = vcmp.gt.f32.partialorder %v2210, 0.0
      %vm2227 = vcmp.gt.f32.partialorder %v2211, 0.0
      %vm2228 = vcmp.gt.f32.partialorder %v2212, 0.0
      %vm2229 = vcmp.gt.f32.partialorder %v2213, 0.0
      %vm2230 = vcmp.gt.f32.partialorder %v2214, 0.0
      %vm2231 = vcmp.gt.f32.partialorder %v2215, 0.0
      %vm2232 = vcmp.gt.f32.partialorder %v2216, 0.0
      %vm2233 = vcmp.gt.f32.partialorder %v2217, 0.0
      %vm2234 = vcmp.gt.f32.partialorder %v2218, 0.0
      %vm2235 = vcmp.gt.f32.partialorder %v2219, 0.0
      %vm2236 = vcmp.gt.f32.partialorder %v2220, 0.0
      %vm2237 = vcmp.gt.f32.partialorder %v2221, 0.0
      %vm2238 = vcmp.gt.f32.partialorder %v2222, 0.0
      %vm2239 = vcmp.gt.f32.partialorder %v2223, 0.0
      %vm2240 = vcmp.gt.f32.partialorder %v2224, 0.0
      %v2241 = vmul.f32 %v2209, 0.1
      %v2242 = vmul.f32 %v2210, 0.1
      %v2243 = vmul.f32 %v2211, 0.1
      %v2244 = vmul.f32 %v2212, 0.1
      %v2245 = vmul.f32 %v2213, 0.1
      %v2246 = vmul.f32 %v2214, 0.1
      %v2247 = vmul.f32 %v2215, 0.1
      %v2248 = vmul.f32 %v2216, 0.1
      %v2249 = vmul.f32 %v2217, 0.1
      %v2250 = vmul.f32 %v2218, 0.1
      %v2251 = vmul.f32 %v2219, 0.1
      %v2252 = vmul.f32 %v2220, 0.1
      %v2253 = vmul.f32 %v2221, 0.1
      %v2254 = vmul.f32 %v2222, 0.1
      %v2255 = vmul.f32 %v2223, 0.1
      %v2256 = vmul.f32 %v2224, 0.1
      %v2257 = vsel %vm2225, %v2209, %v2241
      %v2258 = vsel %vm2226, %v2210, %v2242
      %v2259 = vsel %vm2227, %v2211, %v2243
      %v2260 = vsel %vm2228, %v2212, %v2244
      %v2261 = vsel %vm2229, %v2213, %v2245
      %v2262 = vsel %vm2230, %v2214, %v2246
      %v2263 = vsel %vm2231, %v2215, %v2247
      %v2264 = vsel %vm2232, %v2216, %v2248
      %v2265 = vsel %vm2233, %v2217, %v2249
      %v2266 = vsel %vm2234, %v2218, %v2250
      %v2267 = vsel %vm2235, %v2219, %v2251
      %v2268 = vsel %vm2236, %v2220, %v2252
      %v2269 = vsel %vm2237, %v2221, %v2253
      %v2270 = vsel %vm2238, %v2222, %v2254
      %v2271 = vsel %vm2239, %v2223, %v2255
      %v2272 = vsel %vm2240, %v2224, %v2256
      %v2273 = vadd.f32 %v2257, %v448
      %v2274 = vadd.f32 %v2258, %v449
      %v2275 = vadd.f32 %v2259, %v450
      %v2276 = vadd.f32 %v2260, %v451
      %v2277 = vadd.f32 %v2261, %v452
      %v2278 = vadd.f32 %v2262, %v453
      %v2279 = vadd.f32 %v2263, %v454
      %v2280 = vadd.f32 %v2264, %v455
      %v2281 = vadd.f32 %v2265, %v456
      %v2282 = vadd.f32 %v2266, %v457
      %v2283 = vadd.f32 %v2267, %v458
      %v2284 = vadd.f32 %v2268, %v459
      %v2285 = vadd.f32 %v2269, %v460
      %v2286 = vadd.f32 %v2270, %v461
      %v2287 = vadd.f32 %v2271, %v462
      %v2288 = vadd.f32 %v2272, %v463
      %2289 = vst.msk [vmem:[%s444] sm:$0xff] %vm474, %v2273
      %2290 = vst.msk [vmem:[%s444 + $0x8] sm:$0xff] %vm474, %v2274
      %2291 = vst.msk [vmem:[%s444 + $0x10] sm:$0xff] %vm474, %v2275
      %2292 = vst.msk [vmem:[%s444 + $0x18] sm:$0xff] %vm474, %v2276
      %2293 = vst.msk [vmem:[%s444 + $0x20] sm:$0xff] %vm474, %v2277
      %2294 = vst.msk [vmem:[%s444 + $0x28] sm:$0xff] %vm474, %v2278
      %2295 = vst.msk [vmem:[%s444 + $0x30] sm:$0xff] %vm474, %v2279
      %2296 = vst.msk [vmem:[%s444 + $0x38] sm:$0xff] %vm474, %v2280
      %2297 = vst.msk [vmem:[%s444 + $0x40] sm:$0xff] %vm474, %v2281
      %2298 = vst.msk [vmem:[%s444 + $0x48] sm:$0xff] %vm474, %v2282
      %2299 = vst.msk [vmem:[%s444 + $0x50] sm:$0xff] %vm474, %v2283
      %2300 = vst.msk [vmem:[%s444 + $0x58] sm:$0xff] %vm474, %v2284
      %2301 = vst.msk [vmem:[%s444 + $0x60] sm:$0xff] %vm474, %v2285
      %2302 = vst.msk [vmem:[%s444 + $0x68] sm:$0xff] %vm474, %v2286
      %2303 = vst.msk [vmem:[%s444 + $0x70] sm:$0xff] %vm474, %v2287
      %2304 = vst.msk [vmem:[%s444 + $0x78] sm:$0xff] %vm474, %v2288
      %s2305 = smul.u32 16, %s23
      %p2306 = scmp.lt.s32.totalorder %s22, 1
      %s2307 = scalar_select %p2306, %s22, 1
      %p2308 = scmp.lt.s32.totalorder %s2305, 31
      %s2309 = scalar_select %p2308, %s2305, 31
      %s2310 = smul.addr %s2307, 32
      %s2311 = sadd.s32 %s2309, %s2310
      %s2312 = smul.addr %s2311, 8
      %s2313 = scalar_lea.vmem %s7, %s2312
      // Predicated region
      $region49: #{residual_forward.1} parent=47 // pred_check
        %p2314 = pneg %p234
      $region50: #{residual_forward.1} parent=47 // pred_check_branch
        %2316 = sbr.rel (%p2314) target = $region52
      $region51: #{residual_forward.1} parent=47 // pred_region
        %s2317 = smul.u32 16, %s23
      $region52: #{residual_forward.1} parent=47 // pred_fallthru
        _
    $region48: #{residual_forward.1} parent=5 // pred_fallthru
      _
    %p2318 = scmp.le.s32.totalorder 2, %s13
    // Predicated region
    $region53: #{residual_forward.1} parent=5 // pred_check
      %p2319 = pneg %p2318
    $region54: #{residual_forward.1} parent=5 // pred_check_branch
      %2321 = sbr.rel (%p2319) target = $region56
    $region55: #{residual_forward.1} parent=5 // pred_region
      %s2322 = ssub.s32 %s13, 2
      // Predicated region
      $region57: #{residual_forward.1} parent=55 // pred_check
        %p2323 = pneg %p240
      $region58: #{residual_forward.1} parent=55 // pred_check_branch
        %2325 = sbr.rel (%p2323) target = $region60
      $region59: #{residual_forward.1} parent=55 // pred_region
        %s2326 = smul.u32 16, %s25
        %p2327 = scmp.lt.s32.totalorder %s24, 1
        %s2328 = scalar_select %p2327, %s24, 1
        %p2329 = scmp.lt.s32.totalorder %s2326, 31
        %s2330 = scalar_select %p2329, %s2326, 31
        %s2331 = smul.addr %s2328, 32
        %s2332 = sadd.s32 %s2330, %s2331
        %s2333 = smul.addr %s2332, 8
        %s2334 = scalar_lea.vmem %s7, %s2333
      $region60: #{residual_forward.1} parent=55 // pred_fallthru
        _
    $region56: #{residual_forward.1} parent=5 // pred_fallthru
      _
  $region6: #{residual_forward.1} parent=0 // loop_footer
    %s17 = sadd.s32 1, %s13
  $region7: #{residual_forward.1} parent=0 // loop_footer_branch
    %12 = sbr.rel target = $region3
  $region8: #{residual_forward.1} parent=0 // loop_exit
    _

</llo_original>
